<compile_context>
chip_gen: v7x
topology: tpu7x:2x2x1
jax: 0.10.0
libtpu: 0.0.40
codegen_flags: <defaults>
</compile_context>

<pallas_src>
import numpy as np
import jax
import jax.numpy as jnp
from jax.experimental import pallas as pl
from jax.experimental.pallas import tpu as pltpu


# ------------------------------ fused kernel --------------------------------

def twoway_mlp_kernel(
    # data
    res_ref, att_ref, attagg_ref, conv_ref,
    # weights (BN already folded where the module applies a BN after the Linear)
    w_img1_ref, b_img1_ref,          # stacked [fc1_img_com | fc1_img_spe] : (R, 2F1)
    w2c_ref, b2c_ref,                # fc2_img_com  : (F1, F2)
    w3c_ref, b3c_ref,                # fc3_img_com  : (F2, NC)   (no BN)
    w2s_ref, b2s_ref,                # fc2_img_spe  : (F1, F2)
    w1t_ref, b1t_ref,                # fc1_text     : (A, F1)
    w2t_ref, b2t_ref,                # fc2_text     : (F1, F2)
    w1a_ref, b1a_ref,                # fc1_agg      : (A, F1)
    w2a_ref, b2a_ref,                # fc2_agg      : (F1, F2)
    wac_ref, bac_ref,                # fc_att_concat: (2F2, F2)
    wir_ref, bir_ref,                # fc_img_reconst        : (2F2, R)
    wit_ref, bit_ref,                # fc_img_text_agg_reconst: (2F2, R)
    # outputs
    img_com_out, img_spe_out, img_cls_out, att_cat_out, img_rec_out, it_rec_out,
):
    f32 = jnp.float32

    def relu(x):
        return jnp.maximum(x, 0.0)

    def mm(x, w_ref, b_ref):
        return jnp.dot(x, w_ref[...], preferred_element_type=f32) + b_ref[...]

    bm = res_ref.shape[0]
    A = att_ref.shape[1]
    C = attagg_ref.shape[0]
    F1 = w2c_ref.shape[0]

    res = res_ref[...]
    att = att_ref[...]

    # ---- image branches: one wide MXU pass produces both fc1 outputs --------
    h_img = relu(mm(res, w_img1_ref, b_img1_ref))   # ReLU(BN(fc1)); Dropout(eval)=id
    h_com = h_img[:, :F1]
    h_spe = h_img[:, F1:]

    img_com = mm(h_com, w2c_ref, b2c_ref)           # BN(fc2_img_com)
    img_spe = mm(h_spe, w2s_ref, b2s_ref)           # BN(fc2_img_spe)

    # img_cls = LogSoftmax(fc3_img_com(img_embed_com))
    logits = mm(img_com, w3c_ref, b3c_ref)
    m = jnp.max(logits, axis=-1, keepdims=True)
    z = logits - m
    img_cls = z - jnp.log(jnp.sum(jnp.exp(z), axis=-1, keepdims=True))

    # ---- text branch ---------------------------------------------------------
    h_text = relu(mm(att, w1t_ref, b1t_ref))
    text_embed = mm(h_text, w2t_ref, b2t_ref)

    # ---- 1x1 conv over the nclass_all channel axis (weights/bias in SMEM) ----
    acc = jnp.zeros((bm, A), f32) + conv_ref[C]          # conv bias
    for c in range(C):                                   # unrolled, C is static/small
        acc = acc + conv_ref[c] * attagg_ref[c]
    text_conv1 = relu(acc)

    h_agg = relu(mm(text_conv1, w1a_ref, b1a_ref))
    text_agg = mm(h_agg, w2a_ref, b2a_ref)

    # ---- heads ---------------------------------------------------------------
    # relu(cat(a, b)) == cat(relu(a), relu(b))
    att_cat = jnp.concatenate([relu(text_embed), relu(text_agg)], axis=1)
    att_cat_embed = mm(att_cat, wac_ref, bac_ref)        # BN(fc_att_concat)

    img_cat = jnp.concatenate([relu(img_com), relu(img_spe)], axis=1)
    img_rec = relu(mm(img_cat, wir_ref, bir_ref))

    it_cat = jnp.concatenate([relu(att_cat_embed), relu(img_spe)], axis=1)
    it_rec = relu(mm(it_cat, wit_ref, bit_ref))

    img_com_out[...] = img_com
    img_spe_out[...] = img_spe
    img_cls_out[...] = img_cls
    att_cat_out[...] = att_cat_embed
    img_rec_out[...] = img_rec
    it_rec_out[...] = it_rec


# ------------------------------ BN folding -----------------------------------

def _fold_bn(lin, bn, eps=1e-5):
    """Eval-mode BatchNorm1d folded into the preceding Linear.
    Returns (W_t, b) with W_t:(in,out), b:(1,out)."""
    scale = bn["gamma"] / jnp.sqrt(bn["var"] + eps)
    w_t = lin["w"].T * scale[None, :]
    b = (lin["b"] - bn["mean"]) * scale + bn["beta"]
    return w_t, b[None, :]


def _plain(lin):
    return lin["w"].T, lin["b"][None, :]


# ------------------------------ wrapper ---------------------------------------

def model_forward(params, res, att, att_agg, *, block_b=128):
    """Reproduces MLP_Img_Att_TwoWay_Conv.forward (eval-mode BN/Dropout).

    res     : (B, resSize)
    att     : (B, attSize)
    att_agg : (B, nclass_all * attSize)  (viewed as (B, nclass_all, attSize, 1))
    """
    B, R = res.shape
    A = att.shape[1]
    C = att_agg.shape[1] // A

    # --- fold BN into weights, stack the two fc1 image layers -----------------
    w1c, b1c = _fold_bn(params["fc1_img_com"], params["bn1_img_com"])
    w1s, b1s = _fold_bn(params["fc1_img_spe"], params["bn1_img_spe"])
    w_img1 = jnp.concatenate([w1c, w1s], axis=1)         # (R, 2F1)
    b_img1 = jnp.concatenate([b1c, b1s], axis=1)

    w2c, b2c = _fold_bn(params["fc2_img_com"], params["bn2_img_com"])
    w3c, b3c = _plain(params["fc3_img_com"])
    w2s, b2s = _fold_bn(params["fc2_img_spe"], params["bn2_img_spe"])
    w1t, b1t = _fold_bn(params["fc1_text"], params["bn1_text"])
    w2t, b2t = _fold_bn(params["fc2_text"], params["bn2_text"])
    w1a, b1a = _fold_bn(params["fc1_agg"], params["bn1_agg"])
    w2a, b2a = _fold_bn(params["fc2_agg"], params["bn2_agg"])
    wac, bac = _fold_bn(params["fc_att_concat"], params["bn_att_concat"])
    wir, bir = _plain(params["fc_img_reconst"])
    wit, bit = _plain(params["fc_img_text_agg_reconst"])

    F1 = w1c.shape[1]
    F2 = w2c.shape[1]
    NC = w3c.shape[1]

    # channel-major layout for the 1x1 conv; conv weight+bias packed for SMEM
    attagg_cba = jnp.transpose(att_agg.reshape(B, C, A), (1, 0, 2))   # (C, B, A)
    conv_vec = jnp.concatenate([params["conv1_w"].reshape(-1),
                                params["conv1_b"].reshape(-1)])       # (C+1,)

    bm = min(block_b, B)
    assert B % bm == 0, "batch must be divisible by the batch tile"

    weights = [w_img1, b_img1, w2c, b2c, w3c, b3c, w2s, b2s,
               w1t, b1t, w2t, b2t, w1a, b1a, w2a, b2a,
               wac, bac, wir, bir, wit, bit]

    in_specs = [
        pl.BlockSpec((bm, R), lambda i: (i, 0)),
        pl.BlockSpec((bm, A), lambda i: (i, 0)),
        pl.BlockSpec((C, bm, A), lambda i: (0, i, 0)),
        pl.BlockSpec((C + 1,), lambda i: (0,),
                     memory_space=pltpu.MemorySpace.SMEM),
    ] + [pl.BlockSpec(w.shape, lambda i: (0, 0)) for w in weights]

    out_shape = (
        jax.ShapeDtypeStruct((B, F2), jnp.float32),   # img_embed_com
        jax.ShapeDtypeStruct((B, F2), jnp.float32),   # img_embed_spe
        jax.ShapeDtypeStruct((B, NC), jnp.float32),   # img_cls (log-softmax)
        jax.ShapeDtypeStruct((B, F2), jnp.float32),   # att_concat_embed
        jax.ShapeDtypeStruct((B, R), jnp.float32),    # img_reconst
        jax.ShapeDtypeStruct((B, R), jnp.float32),    # img_text_agg_reconst
    )
    out_specs = (
        pl.BlockSpec((bm, F2), lambda i: (i, 0)),
        pl.BlockSpec((bm, F2), lambda i: (i, 0)),
        pl.BlockSpec((bm, NC), lambda i: (i, 0)),
        pl.BlockSpec((bm, F2), lambda i: (i, 0)),
        pl.BlockSpec((bm, R), lambda i: (i, 0)),
        pl.BlockSpec((bm, R), lambda i: (i, 0)),
    )

    return pl.pallas_call(
        twoway_mlp_kernel,
        out_shape=out_shape,
        grid=(B // bm,),
        in_specs=in_specs,
        out_specs=out_specs,
        compiler_params=pltpu.CompilerParams(
            dimension_semantics=("parallel",)),
    )(res, att, attagg_cba, conv_vec, *weights)


# --------------------------- pure-JAX reference -------------------------------

def reference_forward(params, res, att, att_agg, eps=1e-5):
    hp = jax.lax.Precision.HIGHEST

    def lin(x, p):
        return jnp.dot(x, p["w"].T, precision=hp) + p["b"]

    def bn(x, p):
        return (x - p["mean"]) / jnp.sqrt(p["var"] + eps) * p["gamma"] + p["beta"]

    relu = lambda x: jnp.maximum(x, 0.0)

    img_com = relu(bn(lin(res, params["fc1_img_com"]), params["bn1_img_com"]))
    img_com = bn(lin(img_com, params["fc2_img_com"]), params["bn2_img_com"])
    img_cls = jax.nn.log_softmax(lin(img_com, params["fc3_img_com"]), axis=1)

    img_spe = relu(bn(lin(res, params["fc1_img_spe"]), params["bn1_img_spe"]))
    img_spe = bn(lin(img_spe, params["fc2_img_spe"]), params["bn2_img_spe"])

    text_embed = relu(bn(lin(att, params["fc1_text"]), params["bn1_text"]))
    text_embed = bn(lin(text_embed, params["fc2_text"]), params["bn2_text"])

    B = res.shape[0]
    A = att.shape[1]
    C = att_agg.shape[1] // A
    x = att_agg.reshape(B, C, A)
    text_conv1 = relu(jnp.einsum("bca,c->ba", x, params["conv1_w"], precision=hp)
                      + params["conv1_b"][0])

    text_agg = relu(bn(lin(text_conv1, params["fc1_agg"]), params["bn1_agg"]))
    text_agg = bn(lin(text_agg, params["fc2_agg"]), params["bn2_agg"])

    att_concat = relu(jnp.concatenate([text_embed, text_agg], axis=1))
    att_concat_embed = bn(lin(att_concat, params["fc_att_concat"]),
                          params["bn_att_concat"])

    img_concat = relu(jnp.concatenate([img_com, img_spe], axis=1))
    img_reconst = relu(lin(img_concat, params["fc_img_reconst"]))

    it_concat = relu(jnp.concatenate([att_concat_embed, img_spe], axis=1))
    it_reconst = relu(lin(it_concat, params["fc_img_text_agg_reconst"]))

    return img_com, img_spe, img_cls, att_concat_embed, img_reconst, it_reconst


# ------------------------------- params ---------------------------------------

def init_params(key, res_size, att_size, fc1, fc2, nclass, nclass_all):
    keys = iter(jax.random.split(key, 40))

    def linear(k, din, dout):
        k1, k2 = jax.random.split(k)
        bound = 1.0 / np.sqrt(din)
        return {"w": jax.random.uniform(k1, (dout, din), jnp.float32, -bound, bound),
                "b": jax.random.uniform(k2, (dout,), jnp.float32, -bound, bound)}

    def bn(k, d):
        k1, k2, k3, k4 = jax.random.split(k, 4)
        return {"gamma": jax.random.uniform(k1, (d,), jnp.float32, 0.5, 1.5),
                "beta": jax.random.uniform(k2, (d,), jnp.float32, -0.1, 0.1),
                "mean": 0.1 * jax.random.normal(k3, (d,), jnp.float32),
                "var": jax.random.uniform(k4, (d,), jnp.float32, 0.5, 1.5)}

    return {
        "fc1_img_com": linear(next(keys), res_size, fc1), "bn1_img_com": bn(next(keys), fc1),
        "fc2_img_com": linear(next(keys), fc1, fc2),      "bn2_img_com": bn(next(keys), fc2),
        "fc3_img_com": linear(next(keys), fc2, nclass),
        "fc1_img_spe": linear(next(keys), res_size, fc1), "bn1_img_spe": bn(next(keys), fc1),
        "fc2_img_spe": linear(next(keys), fc1, fc2),      "bn2_img_spe": bn(next(keys), fc2),
        "fc1_text": linear(next(keys), att_size, fc1),    "bn1_text": bn(next(keys), fc1),
        "fc2_text": linear(next(keys), fc1, fc2),         "bn2_text": bn(next(keys), fc2),
        # conv1: 1x1 Conv2d(nclass_all -> 1), init_weights(): weight=0.5, bias=0
        "conv1_w": jnp.full((nclass_all,), 0.5, jnp.float32),
        "conv1_b": jnp.zeros((1,), jnp.float32),
        "fc1_agg": linear(next(keys), att_size, fc1),     "bn1_agg": bn(next(keys), fc1),
        "fc2_agg": linear(next(keys), fc1, fc2),          "bn2_agg": bn(next(keys), fc2),
        "fc_att_concat": linear(next(keys), 2 * fc2, fc2),
        "bn_att_concat": bn(next(keys), fc2),
        "fc_img_reconst": linear(next(keys), 2 * fc2, res_size),
        "fc_img_text_agg_reconst": linear(next(keys), 2 * fc2, res_size),
    }


# --------------------------------- main ----------------------------------------

if __name__ == "__main__":
    # Small, lane-aligned config (all feature dims multiples of 128, batch of 8).
    B = 8
    res_size = 256      # opt.resSize
    att_size = 128      # opt.attSize
    fc1_size = 128      # opt.fc1_size
    fc2_size = 128      # opt.fc2_size
    nclass = 128        # nclass
    nclass_all = 4      # opt.nclass_all

    key = jax.random.PRNGKey(0)
    kp, kr, ka, kg = jax.random.split(key, 4)

    params = init_params(kp, res_size, att_size, fc1_size, fc2_size,
                         nclass, nclass_all)
    res = jax.random.normal(kr, (B, res_size), jnp.float32)
    att = jax.random.normal(ka, (B, att_size), jnp.float32)
    att_agg = jax.random.normal(kg, (B, nclass_all * att_size), jnp.float32)

    outs = model_forward(params, res, att, att_agg)
    outs = jax.block_until_ready(outs)

    refs = reference_forward(params, res, att, att_agg)
    names = ["img_embed_com", "img_embed_spe", "img_cls",
             "att_concat_embed", "img_reconst", "img_text_agg_reconst"]
    for name, o, r in zip(names, outs, refs):
        assert o.shape == r.shape, (name, o.shape, r.shape)
        assert bool(jnp.all(jnp.isfinite(o))), name
        np.testing.assert_allclose(np.asarray(o), np.asarray(r),
                                   rtol=2e-2, atol=2e-2, err_msg=name)

    print("KERNEL_OK")
</pallas_src>

<mosaic_0001>
module attributes {stable_mosaic.version = 11 : i64} {
  func.func @twoway_mlp_kernel(%arg0: i32, %arg1: memref<8x256xf32, #tpu.memory_space<vmem>>, %arg2: memref<8x128xf32, #tpu.memory_space<vmem>>, %arg3: memref<4x8x128xf32, #tpu.memory_space<vmem>>, %arg4: memref<5xf32, #tpu.memory_space<smem>>, %arg5: memref<256x256xf32, #tpu.memory_space<vmem>>, %arg6: memref<1x256xf32, #tpu.memory_space<vmem>>, %arg7: memref<128x128xf32, #tpu.memory_space<vmem>>, %arg8: memref<1x128xf32, #tpu.memory_space<vmem>>, %arg9: memref<128x128xf32, #tpu.memory_space<vmem>>, %arg10: memref<1x128xf32, #tpu.memory_space<vmem>>, %arg11: memref<128x128xf32, #tpu.memory_space<vmem>>, %arg12: memref<1x128xf32, #tpu.memory_space<vmem>>, %arg13: memref<128x128xf32, #tpu.memory_space<vmem>>, %arg14: memref<1x128xf32, #tpu.memory_space<vmem>>, %arg15: memref<128x128xf32, #tpu.memory_space<vmem>>, %arg16: memref<1x128xf32, #tpu.memory_space<vmem>>, %arg17: memref<128x128xf32, #tpu.memory_space<vmem>>, %arg18: memref<1x128xf32, #tpu.memory_space<vmem>>, %arg19: memref<128x128xf32, #tpu.memory_space<vmem>>, %arg20: memref<1x128xf32, #tpu.memory_space<vmem>>, %arg21: memref<256x128xf32, #tpu.memory_space<vmem>>, %arg22: memref<1x128xf32, #tpu.memory_space<vmem>>, %arg23: memref<256x256xf32, #tpu.memory_space<vmem>>, %arg24: memref<1x256xf32, #tpu.memory_space<vmem>>, %arg25: memref<256x256xf32, #tpu.memory_space<vmem>>, %arg26: memref<1x256xf32, #tpu.memory_space<vmem>>, %arg27: memref<8x128xf32, #tpu.memory_space<vmem>>, %arg28: memref<8x128xf32, #tpu.memory_space<vmem>>, %arg29: memref<8x128xf32, #tpu.memory_space<vmem>>, %arg30: memref<8x128xf32, #tpu.memory_space<vmem>>, %arg31: memref<8x256xf32, #tpu.memory_space<vmem>>, %arg32: memref<8x256xf32, #tpu.memory_space<vmem>>) attributes {dimension_semantics = [#tpu.dimension_semantics<parallel>], iteration_bounds = array<i64: 1>, scalar_prefetch = 0 : i64, scratch_operands = 0 : i64, tpu.core_type = #tpu.core_type<tc>, window_params = [{transform_indices = @transform_0, window_bounds = array<i64: 8, 256>}, {transform_indices = @transform_1, window_bounds = array<i64: 8, 128>}, {transform_indices = @transform_2, window_bounds = array<i64: 4, 8, 128>}, {transform_indices = @transform_3, window_bounds = array<i64: 5>}, {pipeline_mode = #tpu.pipeline_mode<synchronous>, transform_indices = @transform_4, window_bounds = array<i64: 256, 256>}, {pipeline_mode = #tpu.pipeline_mode<synchronous>, transform_indices = @transform_5, window_bounds = array<i64: 1, 256>}, {pipeline_mode = #tpu.pipeline_mode<synchronous>, transform_indices = @transform_6, window_bounds = array<i64: 128, 128>}, {pipeline_mode = #tpu.pipeline_mode<synchronous>, transform_indices = @transform_7, window_bounds = array<i64: 1, 128>}, {pipeline_mode = #tpu.pipeline_mode<synchronous>, transform_indices = @transform_8, window_bounds = array<i64: 128, 128>}, {pipeline_mode = #tpu.pipeline_mode<synchronous>, transform_indices = @transform_9, window_bounds = array<i64: 1, 128>}, {pipeline_mode = #tpu.pipeline_mode<synchronous>, transform_indices = @transform_10, window_bounds = array<i64: 128, 128>}, {pipeline_mode = #tpu.pipeline_mode<synchronous>, transform_indices = @transform_11, window_bounds = array<i64: 1, 128>}, {pipeline_mode = #tpu.pipeline_mode<synchronous>, transform_indices = @transform_12, window_bounds = array<i64: 128, 128>}, {pipeline_mode = #tpu.pipeline_mode<synchronous>, transform_indices = @transform_13, window_bounds = array<i64: 1, 128>}, {pipeline_mode = #tpu.pipeline_mode<synchronous>, transform_indices = @transform_14, window_bounds = array<i64: 128, 128>}, {pipeline_mode = #tpu.pipeline_mode<synchronous>, transform_indices = @transform_15, window_bounds = array<i64: 1, 128>}, {pipeline_mode = #tpu.pipeline_mode<synchronous>, transform_indices = @transform_16, window_bounds = array<i64: 128, 128>}, {pipeline_mode = #tpu.pipeline_mode<synchronous>, transform_indices = @transform_17, window_bounds = array<i64: 1, 128>}, {pipeline_mode = #tpu.pipeline_mode<synchronous>, transform_indices = @transform_18, window_bounds = array<i64: 128, 128>}, {pipeline_mode = #tpu.pipeline_mode<synchronous>, transform_indices = @transform_19, window_bounds = array<i64: 1, 128>}, {pipeline_mode = #tpu.pipeline_mode<synchronous>, transform_indices = @transform_20, window_bounds = array<i64: 256, 128>}, {pipeline_mode = #tpu.pipeline_mode<synchronous>, transform_indices = @transform_21, window_bounds = array<i64: 1, 128>}, {pipeline_mode = #tpu.pipeline_mode<synchronous>, transform_indices = @transform_22, window_bounds = array<i64: 256, 256>}, {pipeline_mode = #tpu.pipeline_mode<synchronous>, transform_indices = @transform_23, window_bounds = array<i64: 1, 256>}, {pipeline_mode = #tpu.pipeline_mode<synchronous>, transform_indices = @transform_24, window_bounds = array<i64: 256, 256>}, {pipeline_mode = #tpu.pipeline_mode<synchronous>, transform_indices = @transform_25, window_bounds = array<i64: 1, 256>}, {transform_indices = @transform_26, window_bounds = array<i64: 8, 128>}, {transform_indices = @transform_27, window_bounds = array<i64: 8, 128>}, {transform_indices = @transform_28, window_bounds = array<i64: 8, 128>}, {transform_indices = @transform_29, window_bounds = array<i64: 8, 128>}, {transform_indices = @transform_30, window_bounds = array<i64: 8, 256>}, {transform_indices = @transform_31, window_bounds = array<i64: 8, 256>}]} {
    %c0 = arith.constant 0 : index
    %c0_0 = arith.constant 0 : index
    %0 = vector.load %arg1[%c0, %c0_0] : memref<8x256xf32, #tpu.memory_space<vmem>>, vector<8x256xf32>
    %c0_1 = arith.constant 0 : index
    %c0_2 = arith.constant 0 : index
    %1 = vector.load %arg2[%c0_1, %c0_2] : memref<8x128xf32, #tpu.memory_space<vmem>>, vector<8x128xf32>
    %c0_3 = arith.constant 0 : index
    %c0_4 = arith.constant 0 : index
    %2 = vector.load %arg5[%c0_3, %c0_4] : memref<256x256xf32, #tpu.memory_space<vmem>>, vector<256x256xf32>
    %cst = arith.constant dense<0.000000e+00> : vector<8x256xf32>
    %3 = tpu.matmul %0, %2, %cst {dimension_numbers = #tpu.dot_dimension_numbers<[1], [0], [0], [1], [0, 0, 1, 1], [], []>} : vector<8x256xf32>, vector<256x256xf32>, vector<8x256xf32> -> vector<8x256xf32>
    %c0_5 = arith.constant 0 : index
    %c0_6 = arith.constant 0 : index
    %4 = vector.load %arg6[%c0_5, %c0_6] : memref<1x256xf32, #tpu.memory_space<vmem>>, vector<1x256xf32>
    %5 = vector.broadcast %4 : vector<1x256xf32> to vector<8x256xf32>
    %6 = arith.addf %3, %5 : vector<8x256xf32>
    %cst_7 = arith.constant 0.000000e+00 : f32
    %7 = vector.broadcast %cst_7 : f32 to vector<8x256xf32>
    %8 = arith.maximumf %6, %7 : vector<8x256xf32>
    %9 = vector.extract_strided_slice %8 {offsets = [0, 0], sizes = [8, 128], strides = [1, 1]} : vector<8x256xf32> to vector<8x128xf32>
    %10 = vector.extract_strided_slice %8 {offsets = [0, 128], sizes = [8, 128], strides = [1, 1]} : vector<8x256xf32> to vector<8x128xf32>
    %c0_8 = arith.constant 0 : index
    %c0_9 = arith.constant 0 : index
    %11 = vector.load %arg7[%c0_8, %c0_9] : memref<128x128xf32, #tpu.memory_space<vmem>>, vector<128x128xf32>
    %cst_10 = arith.constant dense<0.000000e+00> : vector<8x128xf32>
    %12 = tpu.matmul %9, %11, %cst_10 {dimension_numbers = #tpu.dot_dimension_numbers<[1], [0], [0], [1], [0, 0, 1, 1], [], []>} : vector<8x128xf32>, vector<128x128xf32>, vector<8x128xf32> -> vector<8x128xf32>
    %c0_11 = arith.constant 0 : index
    %c0_12 = arith.constant 0 : index
    %13 = vector.load %arg8[%c0_11, %c0_12] : memref<1x128xf32, #tpu.memory_space<vmem>>, vector<1x128xf32>
    %14 = vector.broadcast %13 : vector<1x128xf32> to vector<8x128xf32>
    %15 = arith.addf %12, %14 : vector<8x128xf32>
    %c0_13 = arith.constant 0 : index
    %c0_14 = arith.constant 0 : index
    %16 = vector.load %arg11[%c0_13, %c0_14] : memref<128x128xf32, #tpu.memory_space<vmem>>, vector<128x128xf32>
    %cst_15 = arith.constant dense<0.000000e+00> : vector<8x128xf32>
    %17 = tpu.matmul %10, %16, %cst_15 {dimension_numbers = #tpu.dot_dimension_numbers<[1], [0], [0], [1], [0, 0, 1, 1], [], []>} : vector<8x128xf32>, vector<128x128xf32>, vector<8x128xf32> -> vector<8x128xf32>
    %c0_16 = arith.constant 0 : index
    %c0_17 = arith.constant 0 : index
    %18 = vector.load %arg12[%c0_16, %c0_17] : memref<1x128xf32, #tpu.memory_space<vmem>>, vector<1x128xf32>
    %19 = vector.broadcast %18 : vector<1x128xf32> to vector<8x128xf32>
    %20 = arith.addf %17, %19 : vector<8x128xf32>
    %c0_18 = arith.constant 0 : index
    %c0_19 = arith.constant 0 : index
    %21 = vector.load %arg9[%c0_18, %c0_19] : memref<128x128xf32, #tpu.memory_space<vmem>>, vector<128x128xf32>
    %cst_20 = arith.constant dense<0.000000e+00> : vector<8x128xf32>
    %22 = tpu.matmul %15, %21, %cst_20 {dimension_numbers = #tpu.dot_dimension_numbers<[1], [0], [0], [1], [0, 0, 1, 1], [], []>} : vector<8x128xf32>, vector<128x128xf32>, vector<8x128xf32> -> vector<8x128xf32>
    %c0_21 = arith.constant 0 : index
    %c0_22 = arith.constant 0 : index
    %23 = vector.load %arg10[%c0_21, %c0_22] : memref<1x128xf32, #tpu.memory_space<vmem>>, vector<1x128xf32>
    %24 = vector.broadcast %23 : vector<1x128xf32> to vector<8x128xf32>
    %25 = arith.addf %22, %24 : vector<8x128xf32>
    %cst_23 = arith.constant dense<0xFF800000> : vector<8xf32>
    %26 = vector.multi_reduction <maximumf>, %25, %cst_23 [1] : vector<8x128xf32> to vector<8xf32>
    %27 = vector.shape_cast %26 : vector<8xf32> to vector<8x1xf32>
    %28 = vector.broadcast %27 : vector<8x1xf32> to vector<8x128xf32>
    %29 = arith.subf %25, %28 : vector<8x128xf32>
    %30 = math.exp %29 : vector<8x128xf32>
    %cst_24 = arith.constant dense<0.000000e+00> : vector<8xf32>
    %31 = vector.multi_reduction <add>, %30, %cst_24 [1] : vector<8x128xf32> to vector<8xf32>
    %32 = vector.shape_cast %31 : vector<8xf32> to vector<8x1xf32>
    %33 = math.log %32 : vector<8x1xf32>
    %34 = vector.broadcast %33 : vector<8x1xf32> to vector<8x128xf32>
    %35 = arith.subf %29, %34 : vector<8x128xf32>
    %c0_25 = arith.constant 0 : index
    %c0_26 = arith.constant 0 : index
    %36 = vector.load %arg13[%c0_25, %c0_26] : memref<128x128xf32, #tpu.memory_space<vmem>>, vector<128x128xf32>
    %cst_27 = arith.constant dense<0.000000e+00> : vector<8x128xf32>
    %37 = tpu.matmul %1, %36, %cst_27 {dimension_numbers = #tpu.dot_dimension_numbers<[1], [0], [0], [1], [0, 0, 1, 1], [], []>} : vector<8x128xf32>, vector<128x128xf32>, vector<8x128xf32> -> vector<8x128xf32>
    %c0_28 = arith.constant 0 : index
    %c0_29 = arith.constant 0 : index
    %38 = vector.load %arg14[%c0_28, %c0_29] : memref<1x128xf32, #tpu.memory_space<vmem>>, vector<1x128xf32>
    %39 = vector.broadcast %38 : vector<1x128xf32> to vector<8x128xf32>
    %40 = arith.addf %37, %39 : vector<8x128xf32>
    %cst_30 = arith.constant 0.000000e+00 : f32
    %41 = vector.broadcast %cst_30 : f32 to vector<8x128xf32>
    %42 = arith.maximumf %40, %41 : vector<8x128xf32>
    %c0_31 = arith.constant 0 : index
    %c0_32 = arith.constant 0 : index
    %43 = vector.load %arg15[%c0_31, %c0_32] : memref<128x128xf32, #tpu.memory_space<vmem>>, vector<128x128xf32>
    %cst_33 = arith.constant dense<0.000000e+00> : vector<8x128xf32>
    %44 = tpu.matmul %42, %43, %cst_33 {dimension_numbers = #tpu.dot_dimension_numbers<[1], [0], [0], [1], [0, 0, 1, 1], [], []>} : vector<8x128xf32>, vector<128x128xf32>, vector<8x128xf32> -> vector<8x128xf32>
    %c0_34 = arith.constant 0 : index
    %c0_35 = arith.constant 0 : index
    %45 = vector.load %arg16[%c0_34, %c0_35] : memref<1x128xf32, #tpu.memory_space<vmem>>, vector<1x128xf32>
    %46 = vector.broadcast %45 : vector<1x128xf32> to vector<8x128xf32>
    %47 = arith.addf %44, %46 : vector<8x128xf32>
    %cst_36 = arith.constant 0.000000e+00 : f32
    %48 = vector.broadcast %cst_36 : f32 to vector<8x128xf32>
    %c4 = arith.constant 4 : index
    %49 = memref.load %arg4[%c4] : memref<5xf32, #tpu.memory_space<smem>>
    %50 = vector.broadcast %49 : f32 to vector<8x128xf32>
    %51 = arith.addf %48, %50 : vector<8x128xf32>
    %c0_37 = arith.constant 0 : index
    %52 = memref.load %arg4[%c0_37] : memref<5xf32, #tpu.memory_space<smem>>
    %c0_38 = arith.constant 0 : index
    %c0_39 = arith.constant 0 : index
    %c0_40 = arith.constant 0 : index
    %53 = vector.load %arg3[%c0_38, %c0_39, %c0_40] : memref<4x8x128xf32, #tpu.memory_space<vmem>>, vector<1x8x128xf32>
    %54 = vector.shape_cast %53 : vector<1x8x128xf32> to vector<8x128xf32>
    %55 = vector.broadcast %52 : f32 to vector<8x128xf32>
    %56 = arith.mulf %55, %54 : vector<8x128xf32>
    %57 = arith.addf %51, %56 : vector<8x128xf32>
    %c1 = arith.constant 1 : index
    %58 = memref.load %arg4[%c1] : memref<5xf32, #tpu.memory_space<smem>>
    %c1_41 = arith.constant 1 : index
    %c0_42 = arith.constant 0 : index
    %c0_43 = arith.constant 0 : index
    %59 = vector.load %arg3[%c1_41, %c0_42, %c0_43] : memref<4x8x128xf32, #tpu.memory_space<vmem>>, vector<1x8x128xf32>
    %60 = vector.shape_cast %59 : vector<1x8x128xf32> to vector<8x128xf32>
    %61 = vector.broadcast %58 : f32 to vector<8x128xf32>
    %62 = arith.mulf %61, %60 : vector<8x128xf32>
    %63 = arith.addf %57, %62 : vector<8x128xf32>
    %c2 = arith.constant 2 : index
    %64 = memref.load %arg4[%c2] : memref<5xf32, #tpu.memory_space<smem>>
    %c2_44 = arith.constant 2 : index
    %c0_45 = arith.constant 0 : index
    %c0_46 = arith.constant 0 : index
    %65 = vector.load %arg3[%c2_44, %c0_45, %c0_46] : memref<4x8x128xf32, #tpu.memory_space<vmem>>, vector<1x8x128xf32>
    %66 = vector.shape_cast %65 : vector<1x8x128xf32> to vector<8x128xf32>
    %67 = vector.broadcast %64 : f32 to vector<8x128xf32>
    %68 = arith.mulf %67, %66 : vector<8x128xf32>
    %69 = arith.addf %63, %68 : vector<8x128xf32>
    %c3 = arith.constant 3 : index
    %70 = memref.load %arg4[%c3] : memref<5xf32, #tpu.memory_space<smem>>
    %c3_47 = arith.constant 3 : index
    %c0_48 = arith.constant 0 : index
    %c0_49 = arith.constant 0 : index
    %71 = vector.load %arg3[%c3_47, %c0_48, %c0_49] : memref<4x8x128xf32, #tpu.memory_space<vmem>>, vector<1x8x128xf32>
    %72 = vector.shape_cast %71 : vector<1x8x128xf32> to vector<8x128xf32>
    %73 = vector.broadcast %70 : f32 to vector<8x128xf32>
    %74 = arith.mulf %73, %72 : vector<8x128xf32>
    %75 = arith.addf %69, %74 : vector<8x128xf32>
    %cst_50 = arith.constant 0.000000e+00 : f32
    %76 = vector.broadcast %cst_50 : f32 to vector<8x128xf32>
    %77 = arith.maximumf %75, %76 : vector<8x128xf32>
    %c0_51 = arith.constant 0 : index
    %c0_52 = arith.constant 0 : index
    %78 = vector.load %arg17[%c0_51, %c0_52] : memref<128x128xf32, #tpu.memory_space<vmem>>, vector<128x128xf32>
    %cst_53 = arith.constant dense<0.000000e+00> : vector<8x128xf32>
    %79 = tpu.matmul %77, %78, %cst_53 {dimension_numbers = #tpu.dot_dimension_numbers<[1], [0], [0], [1], [0, 0, 1, 1], [], []>} : vector<8x128xf32>, vector<128x128xf32>, vector<8x128xf32> -> vector<8x128xf32>
    %c0_54 = arith.constant 0 : index
    %c0_55 = arith.constant 0 : index
    %80 = vector.load %arg18[%c0_54, %c0_55] : memref<1x128xf32, #tpu.memory_space<vmem>>, vector<1x128xf32>
    %81 = vector.broadcast %80 : vector<1x128xf32> to vector<8x128xf32>
    %82 = arith.addf %79, %81 : vector<8x128xf32>
    %cst_56 = arith.constant 0.000000e+00 : f32
    %83 = vector.broadcast %cst_56 : f32 to vector<8x128xf32>
    %84 = arith.maximumf %82, %83 : vector<8x128xf32>
    %c0_57 = arith.constant 0 : index
    %c0_58 = arith.constant 0 : index
    %85 = vector.load %arg19[%c0_57, %c0_58] : memref<128x128xf32, #tpu.memory_space<vmem>>, vector<128x128xf32>
    %cst_59 = arith.constant dense<0.000000e+00> : vector<8x128xf32>
    %86 = tpu.matmul %84, %85, %cst_59 {dimension_numbers = #tpu.dot_dimension_numbers<[1], [0], [0], [1], [0, 0, 1, 1], [], []>} : vector<8x128xf32>, vector<128x128xf32>, vector<8x128xf32> -> vector<8x128xf32>
    %c0_60 = arith.constant 0 : index
    %c0_61 = arith.constant 0 : index
    %87 = vector.load %arg20[%c0_60, %c0_61] : memref<1x128xf32, #tpu.memory_space<vmem>>, vector<1x128xf32>
    %88 = vector.broadcast %87 : vector<1x128xf32> to vector<8x128xf32>
    %89 = arith.addf %86, %88 : vector<8x128xf32>
    %cst_62 = arith.constant 0.000000e+00 : f32
    %90 = vector.broadcast %cst_62 : f32 to vector<8x128xf32>
    %91 = arith.maximumf %47, %90 : vector<8x128xf32>
    %cst_63 = arith.constant 0.000000e+00 : f32
    %92 = vector.broadcast %cst_63 : f32 to vector<8x128xf32>
    %93 = arith.maximumf %89, %92 : vector<8x128xf32>
    %94 = tpu.concatenate %91, %93 in 1 : vector<8x128xf32>, vector<8x128xf32> -> vector<8x256xf32>
    %c0_64 = arith.constant 0 : index
    %c0_65 = arith.constant 0 : index
    %95 = vector.load %arg21[%c0_64, %c0_65] : memref<256x128xf32, #tpu.memory_space<vmem>>, vector<256x128xf32>
    %cst_66 = arith.constant dense<0.000000e+00> : vector<8x128xf32>
    %96 = tpu.matmul %94, %95, %cst_66 {dimension_numbers = #tpu.dot_dimension_numbers<[1], [0], [0], [1], [0, 0, 1, 1], [], []>} : vector<8x256xf32>, vector<256x128xf32>, vector<8x128xf32> -> vector<8x128xf32>
    %c0_67 = arith.constant 0 : index
    %c0_68 = arith.constant 0 : index
    %97 = vector.load %arg22[%c0_67, %c0_68] : memref<1x128xf32, #tpu.memory_space<vmem>>, vector<1x128xf32>
    %98 = vector.broadcast %97 : vector<1x128xf32> to vector<8x128xf32>
    %99 = arith.addf %96, %98 : vector<8x128xf32>
    %cst_69 = arith.constant 0.000000e+00 : f32
    %100 = vector.broadcast %cst_69 : f32 to vector<8x128xf32>
    %101 = arith.maximumf %15, %100 : vector<8x128xf32>
    %cst_70 = arith.constant 0.000000e+00 : f32
    %102 = vector.broadcast %cst_70 : f32 to vector<8x128xf32>
    %103 = arith.maximumf %20, %102 : vector<8x128xf32>
    %104 = tpu.concatenate %101, %103 in 1 : vector<8x128xf32>, vector<8x128xf32> -> vector<8x256xf32>
    %c0_71 = arith.constant 0 : index
    %c0_72 = arith.constant 0 : index
    %105 = vector.load %arg23[%c0_71, %c0_72] : memref<256x256xf32, #tpu.memory_space<vmem>>, vector<256x256xf32>
    %cst_73 = arith.constant dense<0.000000e+00> : vector<8x256xf32>
    %106 = tpu.matmul %104, %105, %cst_73 {dimension_numbers = #tpu.dot_dimension_numbers<[1], [0], [0], [1], [0, 0, 1, 1], [], []>} : vector<8x256xf32>, vector<256x256xf32>, vector<8x256xf32> -> vector<8x256xf32>
    %c0_74 = arith.constant 0 : index
    %c0_75 = arith.constant 0 : index
    %107 = vector.load %arg24[%c0_74, %c0_75] : memref<1x256xf32, #tpu.memory_space<vmem>>, vector<1x256xf32>
    %108 = vector.broadcast %107 : vector<1x256xf32> to vector<8x256xf32>
    %109 = arith.addf %106, %108 : vector<8x256xf32>
    %cst_76 = arith.constant 0.000000e+00 : f32
    %110 = vector.broadcast %cst_76 : f32 to vector<8x256xf32>
    %111 = arith.maximumf %109, %110 : vector<8x256xf32>
    %cst_77 = arith.constant 0.000000e+00 : f32
    %112 = vector.broadcast %cst_77 : f32 to vector<8x128xf32>
    %113 = arith.maximumf %99, %112 : vector<8x128xf32>
    %cst_78 = arith.constant 0.000000e+00 : f32
    %114 = vector.broadcast %cst_78 : f32 to vector<8x128xf32>
    %115 = arith.maximumf %20, %114 : vector<8x128xf32>
    %116 = tpu.concatenate %113, %115 in 1 : vector<8x128xf32>, vector<8x128xf32> -> vector<8x256xf32>
    %c0_79 = arith.constant 0 : index
    %c0_80 = arith.constant 0 : index
    %117 = vector.load %arg25[%c0_79, %c0_80] : memref<256x256xf32, #tpu.memory_space<vmem>>, vector<256x256xf32>
    %cst_81 = arith.constant dense<0.000000e+00> : vector<8x256xf32>
    %118 = tpu.matmul %116, %117, %cst_81 {dimension_numbers = #tpu.dot_dimension_numbers<[1], [0], [0], [1], [0, 0, 1, 1], [], []>} : vector<8x256xf32>, vector<256x256xf32>, vector<8x256xf32> -> vector<8x256xf32>
    %c0_82 = arith.constant 0 : index
    %c0_83 = arith.constant 0 : index
    %119 = vector.load %arg26[%c0_82, %c0_83] : memref<1x256xf32, #tpu.memory_space<vmem>>, vector<1x256xf32>
    %120 = vector.broadcast %119 : vector<1x256xf32> to vector<8x256xf32>
    %121 = arith.addf %118, %120 : vector<8x256xf32>
    %cst_84 = arith.constant 0.000000e+00 : f32
    %122 = vector.broadcast %cst_84 : f32 to vector<8x256xf32>
    %123 = arith.maximumf %121, %122 : vector<8x256xf32>
    %c0_85 = arith.constant 0 : index
    %c0_86 = arith.constant 0 : index
    %124 = vector.load %arg27[%c0_85, %c0_86] : memref<8x128xf32, #tpu.memory_space<vmem>>, vector<8x128xf32>
    tpu.vector_store %arg27[%c0_85, %c0_86], %15 {strides = array<i32>} : memref<8x128xf32, #tpu.memory_space<vmem>>, vector<8x128xf32>,
    %c0_87 = arith.constant 0 : index
    %c0_88 = arith.constant 0 : index
    %125 = vector.load %arg28[%c0_87, %c0_88] : memref<8x128xf32, #tpu.memory_space<vmem>>, vector<8x128xf32>
    tpu.vector_store %arg28[%c0_87, %c0_88], %20 {strides = array<i32>} : memref<8x128xf32, #tpu.memory_space<vmem>>, vector<8x128xf32>,
    %c0_89 = arith.constant 0 : index
    %c0_90 = arith.constant 0 : index
    %126 = vector.load %arg29[%c0_89, %c0_90] : memref<8x128xf32, #tpu.memory_space<vmem>>, vector<8x128xf32>
    tpu.vector_store %arg29[%c0_89, %c0_90], %35 {strides = array<i32>} : memref<8x128xf32, #tpu.memory_space<vmem>>, vector<8x128xf32>,
    %c0_91 = arith.constant 0 : index
    %c0_92 = arith.constant 0 : index
    %127 = vector.load %arg30[%c0_91, %c0_92] : memref<8x128xf32, #tpu.memory_space<vmem>>, vector<8x128xf32>
    tpu.vector_store %arg30[%c0_91, %c0_92], %99 {strides = array<i32>} : memref<8x128xf32, #tpu.memory_space<vmem>>, vector<8x128xf32>,
    %c0_93 = arith.constant 0 : index
    %c0_94 = arith.constant 0 : index
    %128 = vector.load %arg31[%c0_93, %c0_94] : memref<8x256xf32, #tpu.memory_space<vmem>>, vector<8x256xf32>
    tpu.vector_store %arg31[%c0_93, %c0_94], %111 {strides = array<i32>} : memref<8x256xf32, #tpu.memory_space<vmem>>, vector<8x256xf32>,
    %c0_95 = arith.constant 0 : index
    %c0_96 = arith.constant 0 : index
    %129 = vector.load %arg32[%c0_95, %c0_96] : memref<8x256xf32, #tpu.memory_space<vmem>>, vector<8x256xf32>
    tpu.vector_store %arg32[%c0_95, %c0_96], %123 {strides = array<i32>} : memref<8x256xf32, #tpu.memory_space<vmem>>, vector<8x256xf32>,
    return
  }
  func.func @transform_0(%arg0: i32) -> (i32, i32) {
    %c0_i32 = arith.constant 0 : i32
    %c0_i32_0 = arith.constant 0 : i32
    return %arg0, %c0_i32 : i32, i32
  }
  func.func @transform_1(%arg0: i32) -> (i32, i32) {
    %c0_i32 = arith.constant 0 : i32
    %c0_i32_0 = arith.constant 0 : i32
    return %arg0, %c0_i32 : i32, i32
  }
  func.func @transform_2(%arg0: i32) -> (i32, i32, i32) {
    %c0_i32 = arith.constant 0 : i32
    %c0_i32_0 = arith.constant 0 : i32
    %c0_i32_1 = arith.constant 0 : i32
    return %c0_i32, %arg0, %c0_i32_0 : i32, i32, i32
  }
  func.func @transform_3(%arg0: i32) -> i32 {
    %c0_i32 = arith.constant 0 : i32
    %c0_i32_0 = arith.constant 0 : i32
    return %c0_i32 : i32
  }
  func.func @transform_4(%arg0: i32) -> (i32, i32) {
    %c0_i32 = arith.constant 0 : i32
    %c0_i32_0 = arith.constant 0 : i32
    %c0_i32_1 = arith.constant 0 : i32
    return %c0_i32, %c0_i32_0 : i32, i32
  }
  func.func @transform_5(%arg0: i32) -> (i32, i32) {
    %c0_i32 = arith.constant 0 : i32
    %c0_i32_0 = arith.constant 0 : i32
    %c0_i32_1 = arith.constant 0 : i32
    return %c0_i32, %c0_i32_0 : i32, i32
  }
  func.func @transform_6(%arg0: i32) -> (i32, i32) {
    %c0_i32 = arith.constant 0 : i32
    %c0_i32_0 = arith.constant 0 : i32
    %c0_i32_1 = arith.constant 0 : i32
    return %c0_i32, %c0_i32_0 : i32, i32
  }
  func.func @transform_7(%arg0: i32) -> (i32, i32) {
    %c0_i32 = arith.constant 0 : i32
    %c0_i32_0 = arith.constant 0 : i32
    %c0_i32_1 = arith.constant 0 : i32
    return %c0_i32, %c0_i32_0 : i32, i32
  }
  func.func @transform_8(%arg0: i32) -> (i32, i32) {
    %c0_i32 = arith.constant 0 : i32
    %c0_i32_0 = arith.constant 0 : i32
    %c0_i32_1 = arith.constant 0 : i32
    return %c0_i32, %c0_i32_0 : i32, i32
  }
  func.func @transform_9(%arg0: i32) -> (i32, i32) {
    %c0_i32 = arith.constant 0 : i32
    %c0_i32_0 = arith.constant 0 : i32
    %c0_i32_1 = arith.constant 0 : i32
    return %c0_i32, %c0_i32_0 : i32, i32
  }
  func.func @transform_10(%arg0: i32) -> (i32, i32) {
    %c0_i32 = arith.constant 0 : i32
    %c0_i32_0 = arith.constant 0 : i32
    %c0_i32_1 = arith.constant 0 : i32
    return %c0_i32, %c0_i32_0 : i32, i32
  }
  func.func @transform_11(%arg0: i32) -> (i32, i32) {
    %c0_i32 = arith.constant 0 : i32
    %c0_i32_0 = arith.constant 0 : i32
    %c0_i32_1 = arith.constant 0 : i32
    return %c0_i32, %c0_i32_0 : i32, i32
  }
  func.func @transform_12(%arg0: i32) -> (i32, i32) {
    %c0_i32 = arith.constant 0 : i32
    %c0_i32_0 = arith.constant 0 : i32
    %c0_i32_1 = arith.constant 0 : i32
    return %c0_i32, %c0_i32_0 : i32, i32
  }
  func.func @transform_13(%arg0: i32) -> (i32, i32) {
    %c0_i32 = arith.constant 0 : i32
    %c0_i32_0 = arith.constant 0 : i32
    %c0_i32_1 = arith.constant 0 : i32
    return %c0_i32, %c0_i32_0 : i32, i32
  }
  func.func @transform_14(%arg0: i32) -> (i32, i32) {
    %c0_i32 = arith.constant 0 : i32
    %c0_i32_0 = arith.constant 0 : i32
    %c0_i32_1 = arith.constant 0 : i32
    return %c0_i32, %c0_i32_0 : i32, i32
  }
  func.func @transform_15(%arg0: i32) -> (i32, i32) {
    %c0_i32 = arith.constant 0 : i32
    %c0_i32_0 = arith.constant 0 : i32
    %c0_i32_1 = arith.constant 0 : i32
    return %c0_i32, %c0_i32_0 : i32, i32
  }
  func.func @transform_16(%arg0: i32) -> (i32, i32) {
    %c0_i32 = arith.constant 0 : i32
    %c0_i32_0 = arith.constant 0 : i32
    %c0_i32_1 = arith.constant 0 : i32
    return %c0_i32, %c0_i32_0 : i32, i32
  }
  func.func @transform_17(%arg0: i32) -> (i32, i32) {
    %c0_i32 = arith.constant 0 : i32
    %c0_i32_0 = arith.constant 0 : i32
    %c0_i32_1 = arith.constant 0 : i32
    return %c0_i32, %c0_i32_0 : i32, i32
  }
  func.func @transform_18(%arg0: i32) -> (i32, i32) {
    %c0_i32 = arith.constant 0 : i32
    %c0_i32_0 = arith.constant 0 : i32
    %c0_i32_1 = arith.constant 0 : i32
    return %c0_i32, %c0_i32_0 : i32, i32
  }
  func.func @transform_19(%arg0: i32) -> (i32, i32) {
    %c0_i32 = arith.constant 0 : i32
    %c0_i32_0 = arith.constant 0 : i32
    %c0_i32_1 = arith.constant 0 : i32
    return %c0_i32, %c0_i32_0 : i32, i32
  }
  func.func @transform_20(%arg0: i32) -> (i32, i32) {
    %c0_i32 = arith.constant 0 : i32
    %c0_i32_0 = arith.constant 0 : i32
    %c0_i32_1 = arith.constant 0 : i32
    return %c0_i32, %c0_i32_0 : i32, i32
  }
  func.func @transform_21(%arg0: i32) -> (i32, i32) {
    %c0_i32 = arith.constant 0 : i32
    %c0_i32_0 = arith.constant 0 : i32
    %c0_i32_1 = arith.constant 0 : i32
    return %c0_i32, %c0_i32_0 : i32, i32
  }
  func.func @transform_22(%arg0: i32) -> (i32, i32) {
    %c0_i32 = arith.constant 0 : i32
    %c0_i32_0 = arith.constant 0 : i32
    %c0_i32_1 = arith.constant 0 : i32
    return %c0_i32, %c0_i32_0 : i32, i32
  }
  func.func @transform_23(%arg0: i32) -> (i32, i32) {
    %c0_i32 = arith.constant 0 : i32
    %c0_i32_0 = arith.constant 0 : i32
    %c0_i32_1 = arith.constant 0 : i32
    return %c0_i32, %c0_i32_0 : i32, i32
  }
  func.func @transform_24(%arg0: i32) -> (i32, i32) {
    %c0_i32 = arith.constant 0 : i32
    %c0_i32_0 = arith.constant 0 : i32
    %c0_i32_1 = arith.constant 0 : i32
    return %c0_i32, %c0_i32_0 : i32, i32
  }
  func.func @transform_25(%arg0: i32) -> (i32, i32) {
    %c0_i32 = arith.constant 0 : i32
    %c0_i32_0 = arith.constant 0 : i32
    %c0_i32_1 = arith.constant 0 : i32
    return %c0_i32, %c0_i32_0 : i32, i32
  }
  func.func @transform_26(%arg0: i32) -> (i32, i32) {
    %c0_i32 = arith.constant 0 : i32
    %c0_i32_0 = arith.constant 0 : i32
    return %arg0, %c0_i32 : i32, i32
  }
  func.func @transform_27(%arg0: i32) -> (i32, i32) {
    %c0_i32 = arith.constant 0 : i32
    %c0_i32_0 = arith.constant 0 : i32
    return %arg0, %c0_i32 : i32, i32
  }
  func.func @transform_28(%arg0: i32) -> (i32, i32) {
    %c0_i32 = arith.constant 0 : i32
    %c0_i32_0 = arith.constant 0 : i32
    return %arg0, %c0_i32 : i32, i32
  }
  func.func @transform_29(%arg0: i32) -> (i32, i32) {
    %c0_i32 = arith.constant 0 : i32
    %c0_i32_0 = arith.constant 0 : i32
    return %arg0, %c0_i32 : i32, i32
  }
  func.func @transform_30(%arg0: i32) -> (i32, i32) {
    %c0_i32 = arith.constant 0 : i32
    %c0_i32_0 = arith.constant 0 : i32
    return %arg0, %c0_i32 : i32, i32
  }
  func.func @transform_31(%arg0: i32) -> (i32, i32) {
    %c0_i32 = arith.constant 0 : i32
    %c0_i32_0 = arith.constant 0 : i32
    return %arg0, %c0_i32 : i32, i32
  }
}

</mosaic_0001>

<llo_original>
// kernel: tpu_custom_call.1
$region0: #{tpu_custom_call.1}
  #allocation0 [shape = 'u32[]', space=smem, size = 0x4, offset = 0x4, fixed_abs, tag = 'smem constant byte address 0x4 - core index']
  #allocation1 [shape = 'u32[144,128]{1,0:T(1,128)}', space=vmem, size = 0x12000, scoped, tag = 'internal scratch']
  %s0 = inlined_call_operand.smem [shape: u32[32], index: -1, kind: input, shape index: {}]
  %s1 = sld [smem:[%s0]]
  %s2 = scalar_lea.smem %s0, 1
  %s3 = sld [smem:[%s2]]
  %s4 = scalar_lea.smem %s0, 2
  %s5 = sld [smem:[%s4]]
  %s6 = scalar_lea.smem %s0, 3
  %s7 = sld [smem:[%s6]]
  %s8 = scalar_lea.smem %s0, 4
  %s9 = sld [smem:[%s8]]
  %s10 = scalar_lea.smem %s0, 5
  %s11 = sld [smem:[%s10]]
  %s12 = scalar_lea.smem %s0, 6
  %s13 = sld [smem:[%s12]]
  %s14 = scalar_lea.smem %s0, 7
  %s15 = sld [smem:[%s14]]
  %s16 = scalar_lea.smem %s0, 8
  %s17 = sld [smem:[%s16]]
  %s18 = scalar_lea.smem %s0, 9
  %s19 = sld [smem:[%s18]]
  %s20 = scalar_lea.smem %s0, 10
  %s21 = sld [smem:[%s20]]
  %s22 = scalar_lea.smem %s0, 11
  %s23 = sld [smem:[%s22]]
  %s24 = scalar_lea.smem %s0, 12
  %s25 = sld [smem:[%s24]]
  %s26 = scalar_lea.smem %s0, 13
  %s27 = sld [smem:[%s26]]
  %s28 = scalar_lea.smem %s0, 14
  %s29 = sld [smem:[%s28]]
  %s30 = scalar_lea.smem %s0, 15
  %s31 = sld [smem:[%s30]]
  %s32 = scalar_lea.smem %s0, 16
  %s33 = sld [smem:[%s32]]
  %s34 = scalar_lea.smem %s0, 17
  %s35 = sld [smem:[%s34]]
  %s36 = scalar_lea.smem %s0, 18
  %s37 = sld [smem:[%s36]]
  %s38 = scalar_lea.smem %s0, 19
  %s39 = sld [smem:[%s38]]
  %s40 = scalar_lea.smem %s0, 20
  %s41 = sld [smem:[%s40]]
  %s42 = scalar_lea.smem %s0, 21
  %s43 = sld [smem:[%s42]]
  %s44 = scalar_lea.smem %s0, 22
  %s45 = sld [smem:[%s44]]
  %s46 = scalar_lea.smem %s0, 23
  %s47 = sld [smem:[%s46]]
  %s48 = scalar_lea.smem %s0, 24
  %s49 = sld [smem:[%s48]]
  %s50 = scalar_lea.smem %s0, 25
  %s51 = sld [smem:[%s50]]
  %s52 = scalar_lea.smem %s0, 26
  %s53 = sld [smem:[%s52]]
  %s54 = scalar_lea.smem %s0, 27
  %s55 = sld [smem:[%s54]]
  %s56 = scalar_lea.smem %s0, 28
  %s57 = sld [smem:[%s56]]
  %s58 = scalar_lea.smem %s0, 29
  %s59 = sld [smem:[%s58]]
  %s60 = scalar_lea.smem %s0, 30
  %s61 = sld [smem:[%s60]]
  %s62 = scalar_lea.smem %s0, 31
  %s63 = sld [smem:[%s62]]
  %64 = xla_tuple %s53, %s55, %s57, %s59, %s61, %s63
  %s65 = sld [smem:[#allocation0]]
  $region214: #{tpu_custom_call.1} parent=0
    _
  %s67 = ssub.s32 1, %s65
  %s68 = scalar_select 0, %s67, %s65
  $region1: #{tpu_custom_call.1} parent=0
    #allocation2 [shape = 'u8[8192]{0}', space=vmem, size = 0x2000, scoped, tag = 'input window, operand 0, single buffered']
    #allocation3 [shape = 's32[1]{0}', space=sflag, size = 0x4, scoped, tag = 'scoped memory for tpu_custom_call.1']
    #allocation4 [shape = 's32[1]{0}', space=sflag, size = 0x4, scoped, tag = 'scoped memory for tpu_custom_call.1']
    #allocation5 [shape = 's32[1]{0}', space=sflag, size = 0x4, scoped, tag = 'scoped memory for tpu_custom_call.1']
    #allocation6 [shape = 'u8[4096]{0}', space=vmem, size = 0x1000, scoped, tag = 'input window, operand 1, single buffered']
    #allocation7 [shape = 's32[1]{0}', space=sflag, size = 0x4, scoped, tag = 'scoped memory for tpu_custom_call.1']
    #allocation8 [shape = 'u8[16384]{0}', space=vmem, size = 0x4000, scoped, tag = 'input window, operand 2, single buffered']
    #allocation9 [shape = 'u8[512]{0}', space=smem, size = 0x200, scoped, tag = 'input window, operand 3, single buffered']
    #allocation10 [shape = 'u8[262144]{0}', space=vmem, size = 0x40000, scoped, tag = 'input window, operand 4, single buffered']
    #allocation11 [shape = 's32[1]{0}', space=sflag, size = 0x4, scoped, tag = 'scoped memory for tpu_custom_call.1']
    #allocation12 [shape = 'u8[65536]{0}', space=vmem, size = 0x10000, scoped, tag = 'input window, operand 6, single buffered']
    #allocation13 [shape = 'u8[65536]{0}', space=vmem, size = 0x10000, scoped, tag = 'input window, operand 8, single buffered']
    #allocation14 [shape = 's32[1]{0}', space=sflag, size = 0x4, scoped, tag = 'scoped memory for tpu_custom_call.1']
    #allocation15 [shape = 'u8[65536]{0}', space=vmem, size = 0x10000, scoped, tag = 'input window, operand 10, single buffered']
    #allocation16 [shape = 'u8[65536]{0}', space=vmem, size = 0x10000, scoped, tag = 'input window, operand 12, single buffered']
    #allocation17 [shape = 's32[1]{0}', space=sflag, size = 0x4, scoped, tag = 'scoped memory for tpu_custom_call.1']
    #allocation18 [shape = 'u8[65536]{0}', space=vmem, size = 0x10000, scoped, tag = 'input window, operand 14, single buffered']
    #allocation19 [shape = 'u8[65536]{0}', space=vmem, size = 0x10000, scoped, tag = 'input window, operand 16, single buffered']
    #allocation20 [shape = 's32[1]{0}', space=sflag, size = 0x4, scoped, tag = 'scoped memory for tpu_custom_call.1']
    #allocation21 [shape = 'u8[65536]{0}', space=vmem, size = 0x10000, scoped, tag = 'input window, operand 18, single buffered']
    #allocation22 [shape = 'u8[131072]{0}', space=vmem, size = 0x20000, scoped, tag = 'input window, operand 20, single buffered']
    #allocation23 [shape = 's32[1]{0}', space=sflag, size = 0x4, scoped, tag = 'scoped memory for tpu_custom_call.1']
    #allocation24 [shape = 'u8[262144]{0}', space=vmem, size = 0x40000, scoped, tag = 'input window, operand 22, single buffered']
    #allocation25 [shape = 'u8[262144]{0}', space=vmem, size = 0x40000, scoped, tag = 'input window, operand 24, single buffered']
    #allocation26 [shape = 's32[1]{0}', space=sflag, size = 0x4, scoped, tag = 'scoped memory for tpu_custom_call.1']
    #allocation27 [shape = 'u8[4096]{0}', space=vmem, size = 0x1000, scoped, tag = 'output window, operand 0, single buffered']
    #allocation28 [shape = 'u8[4096]{0}', space=vmem, size = 0x1000, scoped, tag = 'output window, operand 1, single buffered']
    #allocation29 [shape = 's32[1]{0}', space=sflag, size = 0x4, scoped, tag = 'scoped memory for tpu_custom_call.1']
    #allocation30 [shape = 'u8[4096]{0}', space=vmem, size = 0x1000, scoped, tag = 'output window, operand 2, single buffered']
    #allocation31 [shape = 'u8[4096]{0}', space=vmem, size = 0x1000, scoped, tag = 'output window, operand 3, single buffered']
    #allocation32 [shape = 's32[1]{0}', space=sflag, size = 0x4, scoped, tag = 'scoped memory for tpu_custom_call.1']
    #allocation33 [shape = 'u8[8192]{0}', space=vmem, size = 0x2000, scoped, tag = 'output window, operand 4, single buffered']
    #allocation34 [shape = 'u8[8192]{0}', space=vmem, size = 0x2000, scoped, tag = 'output window, operand 5, single buffered']
    #allocation35 [shape = 's32[1]{0}', space=sflag, size = 0x4, scoped, tag = 'scoped memory for tpu_custom_call.1']
    %69 = vsyncpa [#allocation3], 0
    %70 = vsyncpa [#allocation7], 0
    %71 = vsyncpa [#allocation5], 0
    %72 = vsyncpa [#allocation11], 0
    %73 = vsyncpa [#allocation14], 0
    %74 = vsyncpa [#allocation17], 0
    %75 = vsyncpa [#allocation20], 0
    %76 = vsyncpa [#allocation23], 0
    %77 = vsyncpa [#allocation26], 0
    %78 = vsyncpa [#allocation4], 0
    %79 = vsyncpa [#allocation29], 0
    %80 = vsyncpa [#allocation32], 0
    %81 = vsyncpa [#allocation35], 0
    // Predicated region
    $region2: #{tpu_custom_call.1} parent=1 // pred_check
      _
    $region3: #{tpu_custom_call.1} parent=1 // pred_check_branch
      %83 = sbr.rel (0) target = $region5
    $region4: #{tpu_custom_call.1} parent=1 // pred_region
      %s85 = ssub.s32 256, 256
      %86 = vsyncadd [#allocation3], %s85
      %s88 = sshll.u32 [#allocation2], 4
      %s89 = int_to_ptr.vmem [resolvable:$true] %s88
      %91 = dma.hbm_to_vmem [thread:$0]  %s1, 256, %s89, [#allocation3]
    $region5: #{tpu_custom_call.1} parent=1 // pred_fallthru
      _
    // Predicated region
    $region6: #{tpu_custom_call.1} parent=1 // pred_check
      _
    $region7: #{tpu_custom_call.1} parent=1 // pred_check_branch
      %93 = sbr.rel (0) target = $region9
    $region8: #{tpu_custom_call.1} parent=1 // pred_region
      %s95 = ssub.s32 128, 128
      %96 = vsyncadd [#allocation7], %s95
      %s98 = sshll.u32 [#allocation6], 4
      %s99 = int_to_ptr.vmem [resolvable:$true] %s98
      %101 = dma.hbm_to_vmem [thread:$0]  %s3, 128, %s99, [#allocation7]
    $region9: #{tpu_custom_call.1} parent=1 // pred_fallthru
      _
    // Predicated region
    $region10: #{tpu_custom_call.1} parent=1 // pred_check
      _
    $region11: #{tpu_custom_call.1} parent=1 // pred_check_branch
      %103 = sbr.rel (0) target = $region13
    $region12: #{tpu_custom_call.1} parent=1 // pred_region
      %s105 = ssub.s32 512, 512
      %106 = vsyncadd [#allocation7], %s105
      %s107 = sshll.u32 [#allocation8], 4
      %s108 = int_to_ptr.vmem [resolvable:$true] %s107
      %113 = dma.hbm_to_vmem [thread:$0]  %s5, 512, %s108, [#allocation7], 128, 128, 8
    $region13: #{tpu_custom_call.1} parent=1 // pred_fallthru
      _
    // Predicated region
    $region14: #{tpu_custom_call.1} parent=1 // pred_check
      _
    $region15: #{tpu_custom_call.1} parent=1 // pred_check_branch
      %115 = sbr.rel (0) target = $region17
    $region16: #{tpu_custom_call.1} parent=1 // pred_region
      %s117 = ssub.s32 16, 16
      %118 = vsyncadd [#allocation5], %s117
      %s120 = sshll.u32 %s7, 4
      %s121 = int_to_ptr.vmem [resolvable:$true] %s120
      %123 = dma.vmem_to_smem %s121, 16, [#allocation9], [#allocation5]
    $region17: #{tpu_custom_call.1} parent=1 // pred_fallthru
      _
    // Predicated region
    $region18: #{tpu_custom_call.1} parent=1 // pred_check
      _
    $region19: #{tpu_custom_call.1} parent=1 // pred_check_branch
      %125 = sbr.rel (0) target = $region21
    $region20: #{tpu_custom_call.1} parent=1 // pred_region
      %s127 = ssub.s32 8192, 8192
      %128 = vsyncadd [#allocation11], %s127
      %s129 = sshll.u32 [#allocation10], 4
      %s130 = int_to_ptr.vmem [resolvable:$true] %s129
      %135 = dma.hbm_to_vmem [thread:$0]  %s9, 8192, %s130, [#allocation11], 256, 256, 16
    $region21: #{tpu_custom_call.1} parent=1 // pred_fallthru
      _
    // Predicated region
    $region22: #{tpu_custom_call.1} parent=1 // pred_check
      _
    $region23: #{tpu_custom_call.1} parent=1 // pred_check_branch
      %137 = sbr.rel (0) target = $region25
    $region24: #{tpu_custom_call.1} parent=1 // pred_region
      _
    $region25: #{tpu_custom_call.1} parent=1 // pred_fallthru
      _
    // Predicated region
    $region26: #{tpu_custom_call.1} parent=1 // pred_check
      _
    $region27: #{tpu_custom_call.1} parent=1 // pred_check_branch
      %139 = sbr.rel (0) target = $region29
    $region28: #{tpu_custom_call.1} parent=1 // pred_region
      %s141 = ssub.s32 2048, 2048
      %142 = vsyncadd [#allocation11], %s141
      %s143 = sshll.u32 [#allocation12], 4
      %s144 = int_to_ptr.vmem [resolvable:$true] %s143
      %149 = dma.hbm_to_vmem [thread:$0]  %s13, 2048, %s144, [#allocation11], 128, 128, 8
    $region29: #{tpu_custom_call.1} parent=1 // pred_fallthru
      _
    // Predicated region
    $region30: #{tpu_custom_call.1} parent=1 // pred_check
      _
    $region31: #{tpu_custom_call.1} parent=1 // pred_check_branch
      %151 = sbr.rel (0) target = $region33
    $region32: #{tpu_custom_call.1} parent=1 // pred_region
      _
    $region33: #{tpu_custom_call.1} parent=1 // pred_fallthru
      _
    // Predicated region
    $region34: #{tpu_custom_call.1} parent=1 // pred_check
      _
    $region35: #{tpu_custom_call.1} parent=1 // pred_check_branch
      %153 = sbr.rel (0) target = $region37
    $region36: #{tpu_custom_call.1} parent=1 // pred_region
      %s155 = ssub.s32 2048, 2048
      %156 = vsyncadd [#allocation14], %s155
      %s157 = sshll.u32 [#allocation13], 4
      %s158 = int_to_ptr.vmem [resolvable:$true] %s157
      %163 = dma.hbm_to_vmem [thread:$0]  %s17, 2048, %s158, [#allocation14], 128, 128, 8
    $region37: #{tpu_custom_call.1} parent=1 // pred_fallthru
      _
    // Predicated region
    $region38: #{tpu_custom_call.1} parent=1 // pred_check
      _
    $region39: #{tpu_custom_call.1} parent=1 // pred_check_branch
      %165 = sbr.rel (0) target = $region41
    $region40: #{tpu_custom_call.1} parent=1 // pred_region
      _
    $region41: #{tpu_custom_call.1} parent=1 // pred_fallthru
      _
    // Predicated region
    $region42: #{tpu_custom_call.1} parent=1 // pred_check
      _
    $region43: #{tpu_custom_call.1} parent=1 // pred_check_branch
      %167 = sbr.rel (0) target = $region45
    $region44: #{tpu_custom_call.1} parent=1 // pred_region
      %s169 = ssub.s32 2048, 2048
      %170 = vsyncadd [#allocation14], %s169
      %s171 = sshll.u32 [#allocation15], 4
      %s172 = int_to_ptr.vmem [resolvable:$true] %s171
      %177 = dma.hbm_to_vmem [thread:$0]  %s21, 2048, %s172, [#allocation14], 128, 128, 8
    $region45: #{tpu_custom_call.1} parent=1 // pred_fallthru
      _
    // Predicated region
    $region46: #{tpu_custom_call.1} parent=1 // pred_check
      _
    $region47: #{tpu_custom_call.1} parent=1 // pred_check_branch
      %179 = sbr.rel (0) target = $region49
    $region48: #{tpu_custom_call.1} parent=1 // pred_region
      _
    $region49: #{tpu_custom_call.1} parent=1 // pred_fallthru
      _
    // Predicated region
    $region50: #{tpu_custom_call.1} parent=1 // pred_check
      _
    $region51: #{tpu_custom_call.1} parent=1 // pred_check_branch
      %181 = sbr.rel (0) target = $region53
    $region52: #{tpu_custom_call.1} parent=1 // pred_region
      %s183 = ssub.s32 2048, 2048
      %184 = vsyncadd [#allocation17], %s183
      %s185 = sshll.u32 [#allocation16], 4
      %s186 = int_to_ptr.vmem [resolvable:$true] %s185
      %191 = dma.hbm_to_vmem [thread:$0]  %s25, 2048, %s186, [#allocation17], 128, 128, 8
    $region53: #{tpu_custom_call.1} parent=1 // pred_fallthru
      _
    // Predicated region
    $region54: #{tpu_custom_call.1} parent=1 // pred_check
      _
    $region55: #{tpu_custom_call.1} parent=1 // pred_check_branch
      %193 = sbr.rel (0) target = $region57
    $region56: #{tpu_custom_call.1} parent=1 // pred_region
      _
    $region57: #{tpu_custom_call.1} parent=1 // pred_fallthru
      _
    // Predicated region
    $region58: #{tpu_custom_call.1} parent=1 // pred_check
      _
    $region59: #{tpu_custom_call.1} parent=1 // pred_check_branch
      %195 = sbr.rel (0) target = $region61
    $region60: #{tpu_custom_call.1} parent=1 // pred_region
      %s197 = ssub.s32 2048, 2048
      %198 = vsyncadd [#allocation17], %s197
      %s199 = sshll.u32 [#allocation18], 4
      %s200 = int_to_ptr.vmem [resolvable:$true] %s199
      %205 = dma.hbm_to_vmem [thread:$0]  %s29, 2048, %s200, [#allocation17], 128, 128, 8
    $region61: #{tpu_custom_call.1} parent=1 // pred_fallthru
      _
    // Predicated region
    $region62: #{tpu_custom_call.1} parent=1 // pred_check
      _
    $region63: #{tpu_custom_call.1} parent=1 // pred_check_branch
      %207 = sbr.rel (0) target = $region65
    $region64: #{tpu_custom_call.1} parent=1 // pred_region
      _
    $region65: #{tpu_custom_call.1} parent=1 // pred_fallthru
      _
    // Predicated region
    $region66: #{tpu_custom_call.1} parent=1 // pred_check
      _
    $region67: #{tpu_custom_call.1} parent=1 // pred_check_branch
      %209 = sbr.rel (0) target = $region69
    $region68: #{tpu_custom_call.1} parent=1 // pred_region
      %s211 = ssub.s32 2048, 2048
      %212 = vsyncadd [#allocation20], %s211
      %s213 = sshll.u32 [#allocation19], 4
      %s214 = int_to_ptr.vmem [resolvable:$true] %s213
      %219 = dma.hbm_to_vmem [thread:$0]  %s33, 2048, %s214, [#allocation20], 128, 128, 8
    $region69: #{tpu_custom_call.1} parent=1 // pred_fallthru
      _
    // Predicated region
    $region70: #{tpu_custom_call.1} parent=1 // pred_check
      _
    $region71: #{tpu_custom_call.1} parent=1 // pred_check_branch
      %221 = sbr.rel (0) target = $region73
    $region72: #{tpu_custom_call.1} parent=1 // pred_region
      _
    $region73: #{tpu_custom_call.1} parent=1 // pred_fallthru
      _
    // Predicated region
    $region74: #{tpu_custom_call.1} parent=1 // pred_check
      _
    $region75: #{tpu_custom_call.1} parent=1 // pred_check_branch
      %223 = sbr.rel (0) target = $region77
    $region76: #{tpu_custom_call.1} parent=1 // pred_region
      %s225 = ssub.s32 2048, 2048
      %226 = vsyncadd [#allocation20], %s225
      %s227 = sshll.u32 [#allocation21], 4
      %s228 = int_to_ptr.vmem [resolvable:$true] %s227
      %233 = dma.hbm_to_vmem [thread:$0]  %s37, 2048, %s228, [#allocation20], 128, 128, 8
    $region77: #{tpu_custom_call.1} parent=1 // pred_fallthru
      _
    // Predicated region
    $region78: #{tpu_custom_call.1} parent=1 // pred_check
      _
    $region79: #{tpu_custom_call.1} parent=1 // pred_check_branch
      %235 = sbr.rel (0) target = $region81
    $region80: #{tpu_custom_call.1} parent=1 // pred_region
      _
    $region81: #{tpu_custom_call.1} parent=1 // pred_fallthru
      _
    // Predicated region
    $region82: #{tpu_custom_call.1} parent=1 // pred_check
      _
    $region83: #{tpu_custom_call.1} parent=1 // pred_check_branch
      %237 = sbr.rel (0) target = $region85
    $region84: #{tpu_custom_call.1} parent=1 // pred_region
      %s239 = ssub.s32 4096, 4096
      %240 = vsyncadd [#allocation23], %s239
      %s241 = sshll.u32 [#allocation22], 4
      %s242 = int_to_ptr.vmem [resolvable:$true] %s241
      %247 = dma.hbm_to_vmem [thread:$0]  %s41, 4096, %s242, [#allocation23], 128, 128, 8
    $region85: #{tpu_custom_call.1} parent=1 // pred_fallthru
      _
    // Predicated region
    $region86: #{tpu_custom_call.1} parent=1 // pred_check
      _
    $region87: #{tpu_custom_call.1} parent=1 // pred_check_branch
      %249 = sbr.rel (0) target = $region89
    $region88: #{tpu_custom_call.1} parent=1 // pred_region
      _
    $region89: #{tpu_custom_call.1} parent=1 // pred_fallthru
      _
    // Predicated region
    $region90: #{tpu_custom_call.1} parent=1 // pred_check
      _
    $region91: #{tpu_custom_call.1} parent=1 // pred_check_branch
      %251 = sbr.rel (0) target = $region93
    $region92: #{tpu_custom_call.1} parent=1 // pred_region
      %s253 = ssub.s32 8192, 8192
      %254 = vsyncadd [#allocation23], %s253
      %s255 = sshll.u32 [#allocation24], 4
      %s256 = int_to_ptr.vmem [resolvable:$true] %s255
      %261 = dma.hbm_to_vmem [thread:$0]  %s45, 8192, %s256, [#allocation23], 256, 256, 16
    $region93: #{tpu_custom_call.1} parent=1 // pred_fallthru
      _
    // Predicated region
    $region94: #{tpu_custom_call.1} parent=1 // pred_check
      _
    $region95: #{tpu_custom_call.1} parent=1 // pred_check_branch
      %263 = sbr.rel (0) target = $region97
    $region96: #{tpu_custom_call.1} parent=1 // pred_region
      _
    $region97: #{tpu_custom_call.1} parent=1 // pred_fallthru
      _
    // Predicated region
    $region98: #{tpu_custom_call.1} parent=1 // pred_check
      _
    $region99: #{tpu_custom_call.1} parent=1 // pred_check_branch
      %265 = sbr.rel (0) target = $region101
    $region100: #{tpu_custom_call.1} parent=1 // pred_region
      %s267 = ssub.s32 8192, 8192
      %268 = vsyncadd [#allocation26], %s267
      %s269 = sshll.u32 [#allocation25], 4
      %s270 = int_to_ptr.vmem [resolvable:$true] %s269
      %275 = dma.hbm_to_vmem [thread:$0]  %s49, 8192, %s270, [#allocation26], 256, 256, 16
    $region101: #{tpu_custom_call.1} parent=1 // pred_fallthru
      _
    // Predicated region
    $region102: #{tpu_custom_call.1} parent=1 // pred_check
      _
    $region103: #{tpu_custom_call.1} parent=1 // pred_check_branch
      %277 = sbr.rel (0) target = $region105
    $region104: #{tpu_custom_call.1} parent=1 // pred_region
      _
    $region105: #{tpu_custom_call.1} parent=1 // pred_fallthru
      _
    // Predicated region
    $region106: #{tpu_custom_call.1} parent=1 // pred_check
      _
    $region107: #{tpu_custom_call.1} parent=1 // pred_check_branch
      %279 = sbr.rel (0) target = $region109
    $region108: #{tpu_custom_call.1} parent=1 // pred_region
      %280 = dma.done [#allocation3], 256
    $region109: #{tpu_custom_call.1} parent=1 // pred_fallthru
      _
    // Predicated region
    $region110: #{tpu_custom_call.1} parent=1 // pred_check
      _
    $region111: #{tpu_custom_call.1} parent=1 // pred_check_branch
      %282 = sbr.rel (0) target = $region113
    $region112: #{tpu_custom_call.1} parent=1 // pred_region
      %283 = dma.done [#allocation7], 128
    $region113: #{tpu_custom_call.1} parent=1 // pred_fallthru
      _
    // Predicated region
    $region114: #{tpu_custom_call.1} parent=1 // pred_check
      _
    $region115: #{tpu_custom_call.1} parent=1 // pred_check_branch
      %285 = sbr.rel (0) target = $region117
    $region116: #{tpu_custom_call.1} parent=1 // pred_region
      %286 = dma.done [#allocation7], 512
    $region117: #{tpu_custom_call.1} parent=1 // pred_fallthru
      _
    // Predicated region
    $region118: #{tpu_custom_call.1} parent=1 // pred_check
      _
    $region119: #{tpu_custom_call.1} parent=1 // pred_check_branch
      %288 = sbr.rel (0) target = $region121
    $region120: #{tpu_custom_call.1} parent=1 // pred_region
      %289 = dma.done [#allocation5], 16
    $region121: #{tpu_custom_call.1} parent=1 // pred_fallthru
      _
    // Predicated region
    $region122: #{tpu_custom_call.1} parent=1 // pred_check
      _
    $region123: #{tpu_custom_call.1} parent=1 // pred_check_branch
      %291 = sbr.rel (0) target = $region125
    $region124: #{tpu_custom_call.1} parent=1 // pred_region
      %292 = dma.done [#allocation11], 8192
    $region125: #{tpu_custom_call.1} parent=1 // pred_fallthru
      _
    // Predicated region
    $region126: #{tpu_custom_call.1} parent=1 // pred_check
      _
    $region127: #{tpu_custom_call.1} parent=1 // pred_check_branch
      %294 = sbr.rel (0) target = $region129
    $region128: #{tpu_custom_call.1} parent=1 // pred_region
      %295 = dma.done [#allocation11], 2048
    $region129: #{tpu_custom_call.1} parent=1 // pred_fallthru
      _
    // Predicated region
    $region130: #{tpu_custom_call.1} parent=1 // pred_check
      _
    $region131: #{tpu_custom_call.1} parent=1 // pred_check_branch
      %297 = sbr.rel (0) target = $region133
    $region132: #{tpu_custom_call.1} parent=1 // pred_region
      %298 = dma.done [#allocation14], 2048
    $region133: #{tpu_custom_call.1} parent=1 // pred_fallthru
      _
    // Predicated region
    $region134: #{tpu_custom_call.1} parent=1 // pred_check
      _
    $region135: #{tpu_custom_call.1} parent=1 // pred_check_branch
      %300 = sbr.rel (0) target = $region137
    $region136: #{tpu_custom_call.1} parent=1 // pred_region
      %301 = dma.done [#allocation14], 2048
    $region137: #{tpu_custom_call.1} parent=1 // pred_fallthru
      _
    // Predicated region
    $region138: #{tpu_custom_call.1} parent=1 // pred_check
      _
    $region139: #{tpu_custom_call.1} parent=1 // pred_check_branch
      %303 = sbr.rel (0) target = $region141
    $region140: #{tpu_custom_call.1} parent=1 // pred_region
      %304 = dma.done [#allocation17], 2048
    $region141: #{tpu_custom_call.1} parent=1 // pred_fallthru
      _
    // Predicated region
    $region142: #{tpu_custom_call.1} parent=1 // pred_check
      _
    $region143: #{tpu_custom_call.1} parent=1 // pred_check_branch
      %306 = sbr.rel (0) target = $region145
    $region144: #{tpu_custom_call.1} parent=1 // pred_region
      %307 = dma.done [#allocation17], 2048
    $region145: #{tpu_custom_call.1} parent=1 // pred_fallthru
      _
    // Predicated region
    $region146: #{tpu_custom_call.1} parent=1 // pred_check
      _
    $region147: #{tpu_custom_call.1} parent=1 // pred_check_branch
      %309 = sbr.rel (0) target = $region149
    $region148: #{tpu_custom_call.1} parent=1 // pred_region
      %310 = dma.done [#allocation20], 2048
    $region149: #{tpu_custom_call.1} parent=1 // pred_fallthru
      _
    // Predicated region
    $region150: #{tpu_custom_call.1} parent=1 // pred_check
      _
    $region151: #{tpu_custom_call.1} parent=1 // pred_check_branch
      %312 = sbr.rel (0) target = $region153
    $region152: #{tpu_custom_call.1} parent=1 // pred_region
      %313 = dma.done [#allocation20], 2048
    $region153: #{tpu_custom_call.1} parent=1 // pred_fallthru
      _
    // Predicated region
    $region154: #{tpu_custom_call.1} parent=1 // pred_check
      _
    $region155: #{tpu_custom_call.1} parent=1 // pred_check_branch
      %315 = sbr.rel (0) target = $region157
    $region156: #{tpu_custom_call.1} parent=1 // pred_region
      %316 = dma.done [#allocation23], 4096
    $region157: #{tpu_custom_call.1} parent=1 // pred_fallthru
      _
    // Predicated region
    $region158: #{tpu_custom_call.1} parent=1 // pred_check
      _
    $region159: #{tpu_custom_call.1} parent=1 // pred_check_branch
      %318 = sbr.rel (0) target = $region161
    $region160: #{tpu_custom_call.1} parent=1 // pred_region
      %319 = dma.done [#allocation23], 8192
    $region161: #{tpu_custom_call.1} parent=1 // pred_fallthru
      _
    // Predicated region
    $region162: #{tpu_custom_call.1} parent=1 // pred_check
      _
    $region163: #{tpu_custom_call.1} parent=1 // pred_check_branch
      %321 = sbr.rel (0) target = $region165
    $region164: #{tpu_custom_call.1} parent=1 // pred_region
      %322 = dma.done [#allocation26], 8192
    $region165: #{tpu_custom_call.1} parent=1 // pred_fallthru
      _
    %323 = sfence
    %v324 = vld [vmem:[#allocation2] sm:$0xff]
    %v325 = vld [vmem:[#allocation2 + $0x8] sm:$0xff]
    %v326 = vld [vmem:[#allocation6] sm:$0xff]
    %v327 = vld [vmem:[#allocation10] sm:$0xff]
    %v328 = vld [vmem:[#allocation10 + $0x8] sm:$0xff]
    %v329 = vld [vmem:[#allocation10 + $0x10] sm:$0xff]
    %v330 = vld [vmem:[#allocation10 + $0x18] sm:$0xff]
    %v331 = vld [vmem:[#allocation10 + $0x20] sm:$0xff]
    %v332 = vld [vmem:[#allocation10 + $0x28] sm:$0xff]
    %v333 = vld [vmem:[#allocation10 + $0x30] sm:$0xff]
    %v334 = vld [vmem:[#allocation10 + $0x38] sm:$0xff]
    %v335 = vld [vmem:[#allocation10 + $0x40] sm:$0xff]
    %v336 = vld [vmem:[#allocation10 + $0x48] sm:$0xff]
    %v337 = vld [vmem:[#allocation10 + $0x50] sm:$0xff]
    %v338 = vld [vmem:[#allocation10 + $0x58] sm:$0xff]
    %v339 = vld [vmem:[#allocation10 + $0x60] sm:$0xff]
    %v340 = vld [vmem:[#allocation10 + $0x68] sm:$0xff]
    %v341 = vld [vmem:[#allocation10 + $0x70] sm:$0xff]
    %v342 = vld [vmem:[#allocation10 + $0x78] sm:$0xff]
    %v343 = vld [vmem:[#allocation10 + $0x80] sm:$0xff]
    %v344 = vld [vmem:[#allocation10 + $0x88] sm:$0xff]
    %v345 = vld [vmem:[#allocation10 + $0x90] sm:$0xff]
    %v346 = vld [vmem:[#allocation10 + $0x98] sm:$0xff]
    %v347 = vld [vmem:[#allocation10 + $0xa0] sm:$0xff]
    %v348 = vld [vmem:[#allocation10 + $0xa8] sm:$0xff]
    %v349 = vld [vmem:[#allocation10 + $0xb0] sm:$0xff]
    %v350 = vld [vmem:[#allocation10 + $0xb8] sm:$0xff]
    %v351 = vld [vmem:[#allocation10 + $0xc0] sm:$0xff]
    %v352 = vld [vmem:[#allocation10 + $0xc8] sm:$0xff]
    %v353 = vld [vmem:[#allocation10 + $0xd0] sm:$0xff]
    %v354 = vld [vmem:[#allocation10 + $0xd8] sm:$0xff]
    %v355 = vld [vmem:[#allocation10 + $0xe0] sm:$0xff]
    %v356 = vld [vmem:[#allocation10 + $0xe8] sm:$0xff]
    %v357 = vld [vmem:[#allocation10 + $0xf0] sm:$0xff]
    %v358 = vld [vmem:[#allocation10 + $0xf8] sm:$0xff]
    %v359 = vld [vmem:[#allocation10 + $0x100] sm:$0xff]
    %v360 = vld [vmem:[#allocation10 + $0x108] sm:$0xff]
    %v361 = vld [vmem:[#allocation10 + $0x110] sm:$0xff]
    %v362 = vld [vmem:[#allocation10 + $0x118] sm:$0xff]
    %v363 = vld [vmem:[#allocation10 + $0x120] sm:$0xff]
    %v364 = vld [vmem:[#allocation10 + $0x128] sm:$0xff]
    %v365 = vld [vmem:[#allocation10 + $0x130] sm:$0xff]
    %v366 = vld [vmem:[#allocation10 + $0x138] sm:$0xff]
    %v367 = vld [vmem:[#allocation10 + $0x140] sm:$0xff]
    %v368 = vld [vmem:[#allocation10 + $0x148] sm:$0xff]
    %v369 = vld [vmem:[#allocation10 + $0x150] sm:$0xff]
    %v370 = vld [vmem:[#allocation10 + $0x158] sm:$0xff]
    %v371 = vld [vmem:[#allocation10 + $0x160] sm:$0xff]
    %v372 = vld [vmem:[#allocation10 + $0x168] sm:$0xff]
    %v373 = vld [vmem:[#allocation10 + $0x170] sm:$0xff]
    %v374 = vld [vmem:[#allocation10 + $0x178] sm:$0xff]
    %v375 = vld [vmem:[#allocation10 + $0x180] sm:$0xff]
    %v376 = vld [vmem:[#allocation10 + $0x188] sm:$0xff]
    %v377 = vld [vmem:[#allocation10 + $0x190] sm:$0xff]
    %v378 = vld [vmem:[#allocation10 + $0x198] sm:$0xff]
    %v379 = vld [vmem:[#allocation10 + $0x1a0] sm:$0xff]
    %v380 = vld [vmem:[#allocation10 + $0x1a8] sm:$0xff]
    %v381 = vld [vmem:[#allocation10 + $0x1b0] sm:$0xff]
    %v382 = vld [vmem:[#allocation10 + $0x1b8] sm:$0xff]
    %v383 = vld [vmem:[#allocation10 + $0x1c0] sm:$0xff]
    %v384 = vld [vmem:[#allocation10 + $0x1c8] sm:$0xff]
    %v385 = vld [vmem:[#allocation10 + $0x1d0] sm:$0xff]
    %v386 = vld [vmem:[#allocation10 + $0x1d8] sm:$0xff]
    %v387 = vld [vmem:[#allocation10 + $0x1e0] sm:$0xff]
    %v388 = vld [vmem:[#allocation10 + $0x1e8] sm:$0xff]
    %v389 = vld [vmem:[#allocation10 + $0x1f0] sm:$0xff]
    %v390 = vld [vmem:[#allocation10 + $0x1f8] sm:$0xff]
    %v391 = vld [vmem:[%s11] sm:$0x3]
    %v393 = vlaneseq
    %v394 = vshrl.u32 %v393, 7
    %v395 = vsub.s32 0, %v394
    %v396 = vrot.slane %v391, %v395
    %v397 = vlaneseq
    %v398 = vshrl.u32 %v397, 7
    %v399 = vsub.s32 1, %v398
    %v400 = vrot.slane %v391, %v399
    %403 = vmatprep.subr.mxu0 %v328
    %404 = vmatpush1.msra.mxu0 %v327
    %405 = vmatprep.subr.mxu0 %v330
    %406 = vmatpush1.msra.mxu0 %v329
    %407 = vmatprep.subr.mxu0 %v332
    %408 = vmatpush1.msra.mxu0 %v331
    %409 = vmatprep.subr.mxu0 %v334
    %410 = vmatpush1.msra.mxu0 %v333
    %411 = vmatprep.subr.mxu0 %v336
    %412 = vmatpush1.msra.mxu0 %v335
    %413 = vmatprep.subr.mxu0 %v338
    %414 = vmatpush1.msra.mxu0 %v337
    %415 = vmatprep.subr.mxu0 %v340
    %416 = vmatpush1.msra.mxu0 %v339
    %417 = vmatprep.subr.mxu0 %v342
    %418 = vmatpush1.msra.mxu0 %v341
    %419 = vmatprep.subr.mxu0 %v344
    %420 = vmatpush1.msra.mxu0 %v343
    %421 = vmatprep.subr.mxu0 %v346
    %422 = vmatpush1.msra.mxu0 %v345
    %423 = vmatprep.subr.mxu0 %v348
    %424 = vmatpush1.msra.mxu0 %v347
    %425 = vmatprep.subr.mxu0 %v350
    %426 = vmatpush1.msra.mxu0 %v349
    %427 = vmatprep.subr.mxu0 %v352
    %428 = vmatpush1.msra.mxu0 %v351
    %429 = vmatprep.subr.mxu0 %v354
    %430 = vmatpush1.msra.mxu0 %v353
    %431 = vmatprep.subr.mxu0 %v356
    %432 = vmatpush1.msra.mxu0 %v355
    %433 = vmatprep.subr.mxu0 %v358
    %434 = vmatpush1.msra.mxu0 %v357
    %435 = vmatprep.subr.mxu0 %v360
    %436 = vmatpush1.msra.mxu0 %v359
    %437 = vmatprep.subr.mxu0 %v362
    %438 = vmatpush1.msra.mxu0 %v361
    %439 = vmatprep.subr.mxu0 %v364
    %440 = vmatpush1.msra.mxu0 %v363
    %441 = vmatprep.subr.mxu0 %v366
    %442 = vmatpush1.msra.mxu0 %v365
    %443 = vmatprep.subr.mxu0 %v368
    %444 = vmatpush1.msra.mxu0 %v367
    %445 = vmatprep.subr.mxu0 %v370
    %446 = vmatpush1.msra.mxu0 %v369
    %447 = vmatprep.subr.mxu0 %v372
    %448 = vmatpush1.msra.mxu0 %v371
    %449 = vmatprep.subr.mxu0 %v374
    %450 = vmatpush1.msra.mxu0 %v373
    %451 = vmatprep.subr.mxu0 %v376
    %452 = vmatpush1.msra.mxu0 %v375
    %453 = vmatprep.subr.mxu0 %v378
    %454 = vmatpush1.msra.mxu0 %v377
    %455 = vmatprep.subr.mxu0 %v380
    %456 = vmatpush1.msra.mxu0 %v379
    %457 = vmatprep.subr.mxu0 %v382
    %458 = vmatpush1.msra.mxu0 %v381
    %459 = vmatprep.subr.mxu0 %v384
    %460 = vmatpush1.msra.mxu0 %v383
    %461 = vmatprep.subr.mxu0 %v386
    %462 = vmatpush1.msra.mxu0 %v385
    %463 = vmatprep.subr.mxu0 %v388
    %464 = vmatpush1.msra.mxu0 %v387
    %465 = vmatprep.subr.mxu0 %v390
    %466 = vmatpush1.msra.mxu0 %v389
    %467 = vmatprep.mubr.f32.mxu0 %v325
    %468 = vmatmul.mubr.f32.gmra.mrb[0].mxu0 %v324
    %v469 = vpop.f32.mrb[0].mxu0
    %v470 = vadd.f32 %v396, %v469
    %v471 = vpop.f32.mrb[0].mxu0
    %v472 = vadd.f32 %v400, %v471
    %473 = vdwg.mxu0
    %v474 = vmax.f32 %v470, 0.0
    %v475 = vmax.f32 %v472, 0.0
    %v476 = vld [vmem:[#allocation12] sm:$0xff]
    %v477 = vld [vmem:[#allocation12 + $0x8] sm:$0xff]
    %v478 = vld [vmem:[#allocation12 + $0x10] sm:$0xff]
    %v479 = vld [vmem:[#allocation12 + $0x18] sm:$0xff]
    %v480 = vld [vmem:[#allocation12 + $0x20] sm:$0xff]
    %v481 = vld [vmem:[#allocation12 + $0x28] sm:$0xff]
    %v482 = vld [vmem:[#allocation12 + $0x30] sm:$0xff]
    %v483 = vld [vmem:[#allocation12 + $0x38] sm:$0xff]
    %v484 = vld [vmem:[#allocation12 + $0x40] sm:$0xff]
    %v485 = vld [vmem:[#allocation12 + $0x48] sm:$0xff]
    %v486 = vld [vmem:[#allocation12 + $0x50] sm:$0xff]
    %v487 = vld [vmem:[#allocation12 + $0x58] sm:$0xff]
    %v488 = vld [vmem:[#allocation12 + $0x60] sm:$0xff]
    %v489 = vld [vmem:[#allocation12 + $0x68] sm:$0xff]
    %v490 = vld [vmem:[#allocation12 + $0x70] sm:$0xff]
    %v491 = vld [vmem:[#allocation12 + $0x78] sm:$0xff]
    %v492 = vld [vmem:[%s15] sm:$0x1]
    %v494 = vlaneseq
    %v495 = vshrl.u32 %v494, 7
    %v496 = vsub.s32 0, %v495
    %v497 = vrot.slane %v492, %v496
    %499 = vmatprep.subr.mxu0 0.0
    %500 = vmatpush1.msra.mxu0 %v476
    %501 = vmatprep.subr.mxu0 0.0
    %502 = vmatpush1.msra.mxu0 %v477
    %503 = vmatprep.subr.mxu0 0.0
    %504 = vmatpush1.msra.mxu0 %v478
    %505 = vmatprep.subr.mxu0 0.0
    %506 = vmatpush1.msra.mxu0 %v479
    %507 = vmatprep.subr.mxu0 0.0
    %508 = vmatpush1.msra.mxu0 %v480
    %509 = vmatprep.subr.mxu0 0.0
    %510 = vmatpush1.msra.mxu0 %v481
    %511 = vmatprep.subr.mxu0 0.0
    %512 = vmatpush1.msra.mxu0 %v482
    %513 = vmatprep.subr.mxu0 0.0
    %514 = vmatpush1.msra.mxu0 %v483
    %515 = vmatprep.subr.mxu0 0.0
    %516 = vmatpush1.msra.mxu0 %v484
    %517 = vmatprep.subr.mxu0 0.0
    %518 = vmatpush1.msra.mxu0 %v485
    %519 = vmatprep.subr.mxu0 0.0
    %520 = vmatpush1.msra.mxu0 %v486
    %521 = vmatprep.subr.mxu0 0.0
    %522 = vmatpush1.msra.mxu0 %v487
    %523 = vmatprep.subr.mxu0 0.0
    %524 = vmatpush1.msra.mxu0 %v488
    %525 = vmatprep.subr.mxu0 0.0
    %526 = vmatpush1.msra.mxu0 %v489
    %527 = vmatprep.subr.mxu0 0.0
    %528 = vmatpush1.msra.mxu0 %v490
    %529 = vmatprep.subr.mxu0 0.0
    %530 = vmatpush1.msra.mxu0 %v491
    %531 = vmatprep.subr.mxu0 0.0
    %532 = vmatpush1.msra.mxu0 0.0
    %533 = vmatprep.subr.mxu0 0.0
    %534 = vmatpush1.msra.mxu0 0.0
    %535 = vmatprep.subr.mxu0 0.0
    %536 = vmatpush1.msra.mxu0 0.0
    %537 = vmatprep.subr.mxu0 0.0
    %538 = vmatpush1.msra.mxu0 0.0
    %539 = vmatprep.subr.mxu0 0.0
    %540 = vmatpush1.msra.mxu0 0.0
    %541 = vmatprep.subr.mxu0 0.0
    %542 = vmatpush1.msra.mxu0 0.0
    %543 = vmatprep.subr.mxu0 0.0
    %544 = vmatpush1.msra.mxu0 0.0
    %545 = vmatprep.subr.mxu0 0.0
    %546 = vmatpush1.msra.mxu0 0.0
    %547 = vmatprep.subr.mxu0 0.0
    %548 = vmatpush1.msra.mxu0 0.0
    %549 = vmatprep.subr.mxu0 0.0
    %550 = vmatpush1.msra.mxu0 0.0
    %551 = vmatprep.subr.mxu0 0.0
    %552 = vmatpush1.msra.mxu0 0.0
    %553 = vmatprep.subr.mxu0 0.0
    %554 = vmatpush1.msra.mxu0 0.0
    %555 = vmatprep.subr.mxu0 0.0
    %556 = vmatpush1.msra.mxu0 0.0
    %557 = vmatprep.subr.mxu0 0.0
    %558 = vmatpush1.msra.mxu0 0.0
    %559 = vmatprep.subr.mxu0 0.0
    %560 = vmatpush1.msra.mxu0 0.0
    %561 = vmatprep.subr.mxu0 0.0
    %562 = vmatpush1.msra.mxu0 0.0
    %563 = vmatprep.mubr.f32.mxu0 0.0
    %564 = vmatmul.mubr.f32.gmra.mrb[0].mxu0 %v474
    %v565 = vpop.f32.mrb[0].mxu0
    %v566 = vadd.f32 %v497, %v565
    %v567 = vpop.f32.mrb[0].mxu0
    %568 = vdwg.mxu0
    %v569 = vld [vmem:[#allocation15] sm:$0xff]
    %v570 = vld [vmem:[#allocation15 + $0x8] sm:$0xff]
    %v571 = vld [vmem:[#allocation15 + $0x10] sm:$0xff]
    %v572 = vld [vmem:[#allocation15 + $0x18] sm:$0xff]
    %v573 = vld [vmem:[#allocation15 + $0x20] sm:$0xff]
    %v574 = vld [vmem:[#allocation15 + $0x28] sm:$0xff]
    %v575 = vld [vmem:[#allocation15 + $0x30] sm:$0xff]
    %v576 = vld [vmem:[#allocation15 + $0x38] sm:$0xff]
    %v577 = vld [vmem:[#allocation15 + $0x40] sm:$0xff]
    %v578 = vld [vmem:[#allocation15 + $0x48] sm:$0xff]
    %v579 = vld [vmem:[#allocation15 + $0x50] sm:$0xff]
    %v580 = vld [vmem:[#allocation15 + $0x58] sm:$0xff]
    %v581 = vld [vmem:[#allocation15 + $0x60] sm:$0xff]
    %v582 = vld [vmem:[#allocation15 + $0x68] sm:$0xff]
    %v583 = vld [vmem:[#allocation15 + $0x70] sm:$0xff]
    %v584 = vld [vmem:[#allocation15 + $0x78] sm:$0xff]
    %v585 = vld [vmem:[%s23] sm:$0x1]
    %v587 = vlaneseq
    %v588 = vshrl.u32 %v587, 7
    %v589 = vsub.s32 0, %v588
    %v590 = vrot.slane %v585, %v589
    %592 = vmatprep.subr.mxu0 0.0
    %593 = vmatpush1.msra.mxu0 %v569
    %594 = vmatprep.subr.mxu0 0.0
    %595 = vmatpush1.msra.mxu0 %v570
    %596 = vmatprep.subr.mxu0 0.0
    %597 = vmatpush1.msra.mxu0 %v571
    %598 = vmatprep.subr.mxu0 0.0
    %599 = vmatpush1.msra.mxu0 %v572
    %600 = vmatprep.subr.mxu0 0.0
    %601 = vmatpush1.msra.mxu0 %v573
    %602 = vmatprep.subr.mxu0 0.0
    %603 = vmatpush1.msra.mxu0 %v574
    %604 = vmatprep.subr.mxu0 0.0
    %605 = vmatpush1.msra.mxu0 %v575
    %606 = vmatprep.subr.mxu0 0.0
    %607 = vmatpush1.msra.mxu0 %v576
    %608 = vmatprep.subr.mxu0 0.0
    %609 = vmatpush1.msra.mxu0 %v577
    %610 = vmatprep.subr.mxu0 0.0
    %611 = vmatpush1.msra.mxu0 %v578
    %612 = vmatprep.subr.mxu0 0.0
    %613 = vmatpush1.msra.mxu0 %v579
    %614 = vmatprep.subr.mxu0 0.0
    %615 = vmatpush1.msra.mxu0 %v580
    %616 = vmatprep.subr.mxu0 0.0
    %617 = vmatpush1.msra.mxu0 %v581
    %618 = vmatprep.subr.mxu0 0.0
    %619 = vmatpush1.msra.mxu0 %v582
    %620 = vmatprep.subr.mxu0 0.0
    %621 = vmatpush1.msra.mxu0 %v583
    %622 = vmatprep.subr.mxu0 0.0
    %623 = vmatpush1.msra.mxu0 %v584
    %624 = vmatprep.subr.mxu0 0.0
    %625 = vmatpush1.msra.mxu0 0.0
    %626 = vmatprep.subr.mxu0 0.0
    %627 = vmatpush1.msra.mxu0 0.0
    %628 = vmatprep.subr.mxu0 0.0
    %629 = vmatpush1.msra.mxu0 0.0
    %630 = vmatprep.subr.mxu0 0.0
    %631 = vmatpush1.msra.mxu0 0.0
    %632 = vmatprep.subr.mxu0 0.0
    %633 = vmatpush1.msra.mxu0 0.0
    %634 = vmatprep.subr.mxu0 0.0
    %635 = vmatpush1.msra.mxu0 0.0
    %636 = vmatprep.subr.mxu0 0.0
    %637 = vmatpush1.msra.mxu0 0.0
    %638 = vmatprep.subr.mxu0 0.0
    %639 = vmatpush1.msra.mxu0 0.0
    %640 = vmatprep.subr.mxu0 0.0
    %641 = vmatpush1.msra.mxu0 0.0
    %642 = vmatprep.subr.mxu0 0.0
    %643 = vmatpush1.msra.mxu0 0.0
    %644 = vmatprep.subr.mxu0 0.0
    %645 = vmatpush1.msra.mxu0 0.0
    %646 = vmatprep.subr.mxu0 0.0
    %647 = vmatpush1.msra.mxu0 0.0
    %648 = vmatprep.subr.mxu0 0.0
    %649 = vmatpush1.msra.mxu0 0.0
    %650 = vmatprep.subr.mxu0 0.0
    %651 = vmatpush1.msra.mxu0 0.0
    %652 = vmatprep.subr.mxu0 0.0
    %653 = vmatpush1.msra.mxu0 0.0
    %654 = vmatprep.subr.mxu0 0.0
    %655 = vmatpush1.msra.mxu0 0.0
    %656 = vmatprep.mubr.f32.mxu0 0.0
    %657 = vmatmul.mubr.f32.gmra.mrb[0].mxu0 %v475
    %v658 = vpop.f32.mrb[0].mxu0
    %v659 = vadd.f32 %v590, %v658
    %v660 = vpop.f32.mrb[0].mxu0
    %661 = vdwg.mxu0
    %v662 = vld [vmem:[#allocation13] sm:$0xff]
    %v663 = vld [vmem:[#allocation13 + $0x8] sm:$0xff]
    %v664 = vld [vmem:[#allocation13 + $0x10] sm:$0xff]
    %v665 = vld [vmem:[#allocation13 + $0x18] sm:$0xff]
    %v666 = vld [vmem:[#allocation13 + $0x20] sm:$0xff]
    %v667 = vld [vmem:[#allocation13 + $0x28] sm:$0xff]
    %v668 = vld [vmem:[#allocation13 + $0x30] sm:$0xff]
    %v669 = vld [vmem:[#allocation13 + $0x38] sm:$0xff]
    %v670 = vld [vmem:[#allocation13 + $0x40] sm:$0xff]
    %v671 = vld [vmem:[#allocation13 + $0x48] sm:$0xff]
    %v672 = vld [vmem:[#allocation13 + $0x50] sm:$0xff]
    %v673 = vld [vmem:[#allocation13 + $0x58] sm:$0xff]
    %v674 = vld [vmem:[#allocation13 + $0x60] sm:$0xff]
    %v675 = vld [vmem:[#allocation13 + $0x68] sm:$0xff]
    %v676 = vld [vmem:[#allocation13 + $0x70] sm:$0xff]
    %v677 = vld [vmem:[#allocation13 + $0x78] sm:$0xff]
    %v678 = vld [vmem:[%s19] sm:$0x1]
    %v680 = vlaneseq
    %v681 = vshrl.u32 %v680, 7
    %v682 = vsub.s32 0, %v681
    %v683 = vrot.slane %v678, %v682
    %685 = vmatprep.subr.mxu0 0.0
    %686 = vmatpush1.msra.mxu0 %v662
    %687 = vmatprep.subr.mxu0 0.0
    %688 = vmatpush1.msra.mxu0 %v663
    %689 = vmatprep.subr.mxu0 0.0
    %690 = vmatpush1.msra.mxu0 %v664
    %691 = vmatprep.subr.mxu0 0.0
    %692 = vmatpush1.msra.mxu0 %v665
    %693 = vmatprep.subr.mxu0 0.0
    %694 = vmatpush1.msra.mxu0 %v666
    %695 = vmatprep.subr.mxu0 0.0
    %696 = vmatpush1.msra.mxu0 %v667
    %697 = vmatprep.subr.mxu0 0.0
    %698 = vmatpush1.msra.mxu0 %v668
    %699 = vmatprep.subr.mxu0 0.0
    %700 = vmatpush1.msra.mxu0 %v669
    %701 = vmatprep.subr.mxu0 0.0
    %702 = vmatpush1.msra.mxu0 %v670
    %703 = vmatprep.subr.mxu0 0.0
    %704 = vmatpush1.msra.mxu0 %v671
    %705 = vmatprep.subr.mxu0 0.0
    %706 = vmatpush1.msra.mxu0 %v672
    %707 = vmatprep.subr.mxu0 0.0
    %708 = vmatpush1.msra.mxu0 %v673
    %709 = vmatprep.subr.mxu0 0.0
    %710 = vmatpush1.msra.mxu0 %v674
    %711 = vmatprep.subr.mxu0 0.0
    %712 = vmatpush1.msra.mxu0 %v675
    %713 = vmatprep.subr.mxu0 0.0
    %714 = vmatpush1.msra.mxu0 %v676
    %715 = vmatprep.subr.mxu0 0.0
    %716 = vmatpush1.msra.mxu0 %v677
    %717 = vmatprep.subr.mxu0 0.0
    %718 = vmatpush1.msra.mxu0 0.0
    %719 = vmatprep.subr.mxu0 0.0
    %720 = vmatpush1.msra.mxu0 0.0
    %721 = vmatprep.subr.mxu0 0.0
    %722 = vmatpush1.msra.mxu0 0.0
    %723 = vmatprep.subr.mxu0 0.0
    %724 = vmatpush1.msra.mxu0 0.0
    %725 = vmatprep.subr.mxu0 0.0
    %726 = vmatpush1.msra.mxu0 0.0
    %727 = vmatprep.subr.mxu0 0.0
    %728 = vmatpush1.msra.mxu0 0.0
    %729 = vmatprep.subr.mxu0 0.0
    %730 = vmatpush1.msra.mxu0 0.0
    %731 = vmatprep.subr.mxu0 0.0
    %732 = vmatpush1.msra.mxu0 0.0
    %733 = vmatprep.subr.mxu0 0.0
    %734 = vmatpush1.msra.mxu0 0.0
    %735 = vmatprep.subr.mxu0 0.0
    %736 = vmatpush1.msra.mxu0 0.0
    %737 = vmatprep.subr.mxu0 0.0
    %738 = vmatpush1.msra.mxu0 0.0
    %739 = vmatprep.subr.mxu0 0.0
    %740 = vmatpush1.msra.mxu0 0.0
    %741 = vmatprep.subr.mxu0 0.0
    %742 = vmatpush1.msra.mxu0 0.0
    %743 = vmatprep.subr.mxu0 0.0
    %744 = vmatpush1.msra.mxu0 0.0
    %745 = vmatprep.subr.mxu0 0.0
    %746 = vmatpush1.msra.mxu0 0.0
    %747 = vmatprep.subr.mxu0 0.0
    %748 = vmatpush1.msra.mxu0 0.0
    %749 = vmatprep.mubr.f32.mxu0 0.0
    %750 = vmatmul.mubr.f32.gmra.mrb[0].mxu0 %v566
    %v751 = vpop.f32.mrb[0].mxu0
    %v752 = vadd.f32 %v683, %v751
    %v753 = vpop.f32.mrb[0].mxu0
    %754 = vdwg.mxu0
    %755 = vmax.xlane.f32.xlu0 %v752
    %v756 = vpop.xlane.xlu0 %755
    %v757 = vsub.f32 %v752, %v756
    %v758 = vmul.f32 %v757, 1.442695
    %v759 = vpow.pop %v758
    %760 = vadd.xlane.f32.xlu0 %v759
    %v761 = vpop.xlane.xlu0 %760
    %v762 = vlog2.pop %v761
    %v763 = vmul.f32 %v762, 0.6931472
    %v764 = vsub.f32 %v757, %v763
    %v765 = vld [vmem:[#allocation16] sm:$0xff]
    %v766 = vld [vmem:[#allocation16 + $0x8] sm:$0xff]
    %v767 = vld [vmem:[#allocation16 + $0x10] sm:$0xff]
    %v768 = vld [vmem:[#allocation16 + $0x18] sm:$0xff]
    %v769 = vld [vmem:[#allocation16 + $0x20] sm:$0xff]
    %v770 = vld [vmem:[#allocation16 + $0x28] sm:$0xff]
    %v771 = vld [vmem:[#allocation16 + $0x30] sm:$0xff]
    %v772 = vld [vmem:[#allocation16 + $0x38] sm:$0xff]
    %v773 = vld [vmem:[#allocation16 + $0x40] sm:$0xff]
    %v774 = vld [vmem:[#allocation16 + $0x48] sm:$0xff]
    %v775 = vld [vmem:[#allocation16 + $0x50] sm:$0xff]
    %v776 = vld [vmem:[#allocation16 + $0x58] sm:$0xff]
    %v777 = vld [vmem:[#allocation16 + $0x60] sm:$0xff]
    %v778 = vld [vmem:[#allocation16 + $0x68] sm:$0xff]
    %v779 = vld [vmem:[#allocation16 + $0x70] sm:$0xff]
    %v780 = vld [vmem:[#allocation16 + $0x78] sm:$0xff]
    %v781 = vld [vmem:[%s27] sm:$0x1]
    %v783 = vlaneseq
    %v784 = vshrl.u32 %v783, 7
    %v785 = vsub.s32 0, %v784
    %v786 = vrot.slane %v781, %v785
    %788 = vmatprep.subr.mxu0 0.0
    %789 = vmatpush1.msra.mxu0 %v765
    %790 = vmatprep.subr.mxu0 0.0
    %791 = vmatpush1.msra.mxu0 %v766
    %792 = vmatprep.subr.mxu0 0.0
    %793 = vmatpush1.msra.mxu0 %v767
    %794 = vmatprep.subr.mxu0 0.0
    %795 = vmatpush1.msra.mxu0 %v768
    %796 = vmatprep.subr.mxu0 0.0
    %797 = vmatpush1.msra.mxu0 %v769
    %798 = vmatprep.subr.mxu0 0.0
    %799 = vmatpush1.msra.mxu0 %v770
    %800 = vmatprep.subr.mxu0 0.0
    %801 = vmatpush1.msra.mxu0 %v771
    %802 = vmatprep.subr.mxu0 0.0
    %803 = vmatpush1.msra.mxu0 %v772
    %804 = vmatprep.subr.mxu0 0.0
    %805 = vmatpush1.msra.mxu0 %v773
    %806 = vmatprep.subr.mxu0 0.0
    %807 = vmatpush1.msra.mxu0 %v774
    %808 = vmatprep.subr.mxu0 0.0
    %809 = vmatpush1.msra.mxu0 %v775
    %810 = vmatprep.subr.mxu0 0.0
    %811 = vmatpush1.msra.mxu0 %v776
    %812 = vmatprep.subr.mxu0 0.0
    %813 = vmatpush1.msra.mxu0 %v777
    %814 = vmatprep.subr.mxu0 0.0
    %815 = vmatpush1.msra.mxu0 %v778
    %816 = vmatprep.subr.mxu0 0.0
    %817 = vmatpush1.msra.mxu0 %v779
    %818 = vmatprep.subr.mxu0 0.0
    %819 = vmatpush1.msra.mxu0 %v780
    %820 = vmatprep.subr.mxu0 0.0
    %821 = vmatpush1.msra.mxu0 0.0
    %822 = vmatprep.subr.mxu0 0.0
    %823 = vmatpush1.msra.mxu0 0.0
    %824 = vmatprep.subr.mxu0 0.0
    %825 = vmatpush1.msra.mxu0 0.0
    %826 = vmatprep.subr.mxu0 0.0
    %827 = vmatpush1.msra.mxu0 0.0
    %828 = vmatprep.subr.mxu0 0.0
    %829 = vmatpush1.msra.mxu0 0.0
    %830 = vmatprep.subr.mxu0 0.0
    %831 = vmatpush1.msra.mxu0 0.0
    %832 = vmatprep.subr.mxu0 0.0
    %833 = vmatpush1.msra.mxu0 0.0
    %834 = vmatprep.subr.mxu0 0.0
    %835 = vmatpush1.msra.mxu0 0.0
    %836 = vmatprep.subr.mxu0 0.0
    %837 = vmatpush1.msra.mxu0 0.0
    %838 = vmatprep.subr.mxu0 0.0
    %839 = vmatpush1.msra.mxu0 0.0
    %840 = vmatprep.subr.mxu0 0.0
    %841 = vmatpush1.msra.mxu0 0.0
    %842 = vmatprep.subr.mxu0 0.0
    %843 = vmatpush1.msra.mxu0 0.0
    %844 = vmatprep.subr.mxu0 0.0
    %845 = vmatpush1.msra.mxu0 0.0
    %846 = vmatprep.subr.mxu0 0.0
    %847 = vmatpush1.msra.mxu0 0.0
    %848 = vmatprep.subr.mxu0 0.0
    %849 = vmatpush1.msra.mxu0 0.0
    %850 = vmatprep.subr.mxu0 0.0
    %851 = vmatpush1.msra.mxu0 0.0
    %852 = vmatprep.mubr.f32.mxu0 0.0
    %853 = vmatmul.mubr.f32.gmra.mrb[0].mxu0 %v326
    %v854 = vpop.f32.mrb[0].mxu0
    %v855 = vadd.f32 %v786, %v854
    %v856 = vpop.f32.mrb[0].mxu0
    %857 = vdwg.mxu0
    %v858 = vmax.f32 %v855, 0.0
    %v859 = vld [vmem:[#allocation18] sm:$0xff]
    %v860 = vld [vmem:[#allocation18 + $0x8] sm:$0xff]
    %v861 = vld [vmem:[#allocation18 + $0x10] sm:$0xff]
    %v862 = vld [vmem:[#allocation18 + $0x18] sm:$0xff]
    %v863 = vld [vmem:[#allocation18 + $0x20] sm:$0xff]
    %v864 = vld [vmem:[#allocation18 + $0x28] sm:$0xff]
    %v865 = vld [vmem:[#allocation18 + $0x30] sm:$0xff]
    %v866 = vld [vmem:[#allocation18 + $0x38] sm:$0xff]
    %v867 = vld [vmem:[#allocation18 + $0x40] sm:$0xff]
    %v868 = vld [vmem:[#allocation18 + $0x48] sm:$0xff]
    %v869 = vld [vmem:[#allocation18 + $0x50] sm:$0xff]
    %v870 = vld [vmem:[#allocation18 + $0x58] sm:$0xff]
    %v871 = vld [vmem:[#allocation18 + $0x60] sm:$0xff]
    %v872 = vld [vmem:[#allocation18 + $0x68] sm:$0xff]
    %v873 = vld [vmem:[#allocation18 + $0x70] sm:$0xff]
    %v874 = vld [vmem:[#allocation18 + $0x78] sm:$0xff]
    %v875 = vld [vmem:[%s31] sm:$0x1]
    %v877 = vlaneseq
    %v878 = vshrl.u32 %v877, 7
    %v879 = vsub.s32 0, %v878
    %v880 = vrot.slane %v875, %v879
    %882 = vmatprep.subr.mxu0 0.0
    %883 = vmatpush1.msra.mxu0 %v859
    %884 = vmatprep.subr.mxu0 0.0
    %885 = vmatpush1.msra.mxu0 %v860
    %886 = vmatprep.subr.mxu0 0.0
    %887 = vmatpush1.msra.mxu0 %v861
    %888 = vmatprep.subr.mxu0 0.0
    %889 = vmatpush1.msra.mxu0 %v862
    %890 = vmatprep.subr.mxu0 0.0
    %891 = vmatpush1.msra.mxu0 %v863
    %892 = vmatprep.subr.mxu0 0.0
    %893 = vmatpush1.msra.mxu0 %v864
    %894 = vmatprep.subr.mxu0 0.0
    %895 = vmatpush1.msra.mxu0 %v865
    %896 = vmatprep.subr.mxu0 0.0
    %897 = vmatpush1.msra.mxu0 %v866
    %898 = vmatprep.subr.mxu0 0.0
    %899 = vmatpush1.msra.mxu0 %v867
    %900 = vmatprep.subr.mxu0 0.0
    %901 = vmatpush1.msra.mxu0 %v868
    %902 = vmatprep.subr.mxu0 0.0
    %903 = vmatpush1.msra.mxu0 %v869
    %904 = vmatprep.subr.mxu0 0.0
    %905 = vmatpush1.msra.mxu0 %v870
    %906 = vmatprep.subr.mxu0 0.0
    %907 = vmatpush1.msra.mxu0 %v871
    %908 = vmatprep.subr.mxu0 0.0
    %909 = vmatpush1.msra.mxu0 %v872
    %910 = vmatprep.subr.mxu0 0.0
    %911 = vmatpush1.msra.mxu0 %v873
    %912 = vmatprep.subr.mxu0 0.0
    %913 = vmatpush1.msra.mxu0 %v874
    %914 = vmatprep.subr.mxu0 0.0
    %915 = vmatpush1.msra.mxu0 0.0
    %916 = vmatprep.subr.mxu0 0.0
    %917 = vmatpush1.msra.mxu0 0.0
    %918 = vmatprep.subr.mxu0 0.0
    %919 = vmatpush1.msra.mxu0 0.0
    %920 = vmatprep.subr.mxu0 0.0
    %921 = vmatpush1.msra.mxu0 0.0
    %922 = vmatprep.subr.mxu0 0.0
    %923 = vmatpush1.msra.mxu0 0.0
    %924 = vmatprep.subr.mxu0 0.0
    %925 = vmatpush1.msra.mxu0 0.0
    %926 = vmatprep.subr.mxu0 0.0
    %927 = vmatpush1.msra.mxu0 0.0
    %928 = vmatprep.subr.mxu0 0.0
    %929 = vmatpush1.msra.mxu0 0.0
    %930 = vmatprep.subr.mxu0 0.0
    %931 = vmatpush1.msra.mxu0 0.0
    %932 = vmatprep.subr.mxu0 0.0
    %933 = vmatpush1.msra.mxu0 0.0
    %934 = vmatprep.subr.mxu0 0.0
    %935 = vmatpush1.msra.mxu0 0.0
    %936 = vmatprep.subr.mxu0 0.0
    %937 = vmatpush1.msra.mxu0 0.0
    %938 = vmatprep.subr.mxu0 0.0
    %939 = vmatpush1.msra.mxu0 0.0
    %940 = vmatprep.subr.mxu0 0.0
    %941 = vmatpush1.msra.mxu0 0.0
    %942 = vmatprep.subr.mxu0 0.0
    %943 = vmatpush1.msra.mxu0 0.0
    %944 = vmatprep.subr.mxu0 0.0
    %945 = vmatpush1.msra.mxu0 0.0
    %946 = vmatprep.mubr.f32.mxu0 0.0
    %947 = vmatmul.mubr.f32.gmra.mrb[0].mxu0 %v858
    %v948 = vpop.f32.mrb[0].mxu0
    %v949 = vadd.f32 %v880, %v948
    %v950 = vpop.f32.mrb[0].mxu0
    %951 = vdwg.mxu0
    %s952 = sld [smem:[#allocation9 + $0x4]]
    %v953 = vstv %s952
    %v954 = vadd.f32 %v953, 0.0
    %s955 = sld [smem:[#allocation9]]
    %v956 = vld [vmem:[#allocation8] sm:$0xff]
    %v957 = vstv %s955
    %v958 = vmul.f32 %v957, %v956
    %v959 = vadd.f32 %v954, %v958
    %s960 = sld [smem:[#allocation9 + $0x1]]
    %s961 = scalar_lea.vmem [#allocation8], 8
    %v962 = vld [vmem:[%s961] sm:$0xff]
    %v963 = vstv %s960
    %v964 = vmul.f32 %v963, %v962
    %v965 = vadd.f32 %v959, %v964
    %s966 = sld [smem:[#allocation9 + $0x2]]
    %s967 = scalar_lea.vmem [#allocation8], 16
    %v968 = vld [vmem:[%s967] sm:$0xff]
    %v969 = vstv %s966
    %v970 = vmul.f32 %v969, %v968
    %v971 = vadd.f32 %v965, %v970
    %s972 = sld [smem:[#allocation9 + $0x3]]
    %s973 = scalar_lea.vmem [#allocation8], 24
    %v974 = vld [vmem:[%s973] sm:$0xff]
    %v975 = vstv %s972
    %v976 = vmul.f32 %v975, %v974
    %v977 = vadd.f32 %v971, %v976
    %v978 = vmax.f32 %v977, 0.0
    %v979 = vld [vmem:[#allocation19] sm:$0xff]
    %v980 = vld [vmem:[#allocation19 + $0x8] sm:$0xff]
    %v981 = vld [vmem:[#allocation19 + $0x10] sm:$0xff]
    %v982 = vld [vmem:[#allocation19 + $0x18] sm:$0xff]
    %v983 = vld [vmem:[#allocation19 + $0x20] sm:$0xff]
    %v984 = vld [vmem:[#allocation19 + $0x28] sm:$0xff]
    %v985 = vld [vmem:[#allocation19 + $0x30] sm:$0xff]
    %v986 = vld [vmem:[#allocation19 + $0x38] sm:$0xff]
    %v987 = vld [vmem:[#allocation19 + $0x40] sm:$0xff]
    %v988 = vld [vmem:[#allocation19 + $0x48] sm:$0xff]
    %v989 = vld [vmem:[#allocation19 + $0x50] sm:$0xff]
    %v990 = vld [vmem:[#allocation19 + $0x58] sm:$0xff]
    %v991 = vld [vmem:[#allocation19 + $0x60] sm:$0xff]
    %v992 = vld [vmem:[#allocation19 + $0x68] sm:$0xff]
    %v993 = vld [vmem:[#allocation19 + $0x70] sm:$0xff]
    %v994 = vld [vmem:[#allocation19 + $0x78] sm:$0xff]
    %v995 = vld [vmem:[%s35] sm:$0x1]
    %v997 = vlaneseq
    %v998 = vshrl.u32 %v997, 7
    %v999 = vsub.s32 0, %v998
    %v1000 = vrot.slane %v995, %v999
    %1002 = vmatprep.subr.mxu0 0.0
    %1003 = vmatpush1.msra.mxu0 %v979
    %1004 = vmatprep.subr.mxu0 0.0
    %1005 = vmatpush1.msra.mxu0 %v980
    %1006 = vmatprep.subr.mxu0 0.0
    %1007 = vmatpush1.msra.mxu0 %v981
    %1008 = vmatprep.subr.mxu0 0.0
    %1009 = vmatpush1.msra.mxu0 %v982
    %1010 = vmatprep.subr.mxu0 0.0
    %1011 = vmatpush1.msra.mxu0 %v983
    %1012 = vmatprep.subr.mxu0 0.0
    %1013 = vmatpush1.msra.mxu0 %v984
    %1014 = vmatprep.subr.mxu0 0.0
    %1015 = vmatpush1.msra.mxu0 %v985
    %1016 = vmatprep.subr.mxu0 0.0
    %1017 = vmatpush1.msra.mxu0 %v986
    %1018 = vmatprep.subr.mxu0 0.0
    %1019 = vmatpush1.msra.mxu0 %v987
    %1020 = vmatprep.subr.mxu0 0.0
    %1021 = vmatpush1.msra.mxu0 %v988
    %1022 = vmatprep.subr.mxu0 0.0
    %1023 = vmatpush1.msra.mxu0 %v989
    %1024 = vmatprep.subr.mxu0 0.0
    %1025 = vmatpush1.msra.mxu0 %v990
    %1026 = vmatprep.subr.mxu0 0.0
    %1027 = vmatpush1.msra.mxu0 %v991
    %1028 = vmatprep.subr.mxu0 0.0
    %1029 = vmatpush1.msra.mxu0 %v992
    %1030 = vmatprep.subr.mxu0 0.0
    %1031 = vmatpush1.msra.mxu0 %v993
    %1032 = vmatprep.subr.mxu0 0.0
    %1033 = vmatpush1.msra.mxu0 %v994
    %1034 = vmatprep.subr.mxu0 0.0
    %1035 = vmatpush1.msra.mxu0 0.0
    %1036 = vmatprep.subr.mxu0 0.0
    %1037 = vmatpush1.msra.mxu0 0.0
    %1038 = vmatprep.subr.mxu0 0.0
    %1039 = vmatpush1.msra.mxu0 0.0
    %1040 = vmatprep.subr.mxu0 0.0
    %1041 = vmatpush1.msra.mxu0 0.0
    %1042 = vmatprep.subr.mxu0 0.0
    %1043 = vmatpush1.msra.mxu0 0.0
    %1044 = vmatprep.subr.mxu0 0.0
    %1045 = vmatpush1.msra.mxu0 0.0
    %1046 = vmatprep.subr.mxu0 0.0
    %1047 = vmatpush1.msra.mxu0 0.0
    %1048 = vmatprep.subr.mxu0 0.0
    %1049 = vmatpush1.msra.mxu0 0.0
    %1050 = vmatprep.subr.mxu0 0.0
    %1051 = vmatpush1.msra.mxu0 0.0
    %1052 = vmatprep.subr.mxu0 0.0
    %1053 = vmatpush1.msra.mxu0 0.0
    %1054 = vmatprep.subr.mxu0 0.0
    %1055 = vmatpush1.msra.mxu0 0.0
    %1056 = vmatprep.subr.mxu0 0.0
    %1057 = vmatpush1.msra.mxu0 0.0
    %1058 = vmatprep.subr.mxu0 0.0
    %1059 = vmatpush1.msra.mxu0 0.0
    %1060 = vmatprep.subr.mxu0 0.0
    %1061 = vmatpush1.msra.mxu0 0.0
    %1062 = vmatprep.subr.mxu0 0.0
    %1063 = vmatpush1.msra.mxu0 0.0
    %1064 = vmatprep.subr.mxu0 0.0
    %1065 = vmatpush1.msra.mxu0 0.0
    %1066 = vmatprep.mubr.f32.mxu0 0.0
    %1067 = vmatmul.mubr.f32.gmra.mrb[0].mxu0 %v978
    %v1068 = vpop.f32.mrb[0].mxu0
    %v1069 = vadd.f32 %v1000, %v1068
    %v1070 = vpop.f32.mrb[0].mxu0
    %1071 = vdwg.mxu0
    %v1072 = vmax.f32 %v1069, 0.0
    %v1073 = vld [vmem:[#allocation21] sm:$0xff]
    %v1074 = vld [vmem:[#allocation21 + $0x8] sm:$0xff]
    %v1075 = vld [vmem:[#allocation21 + $0x10] sm:$0xff]
    %v1076 = vld [vmem:[#allocation21 + $0x18] sm:$0xff]
    %v1077 = vld [vmem:[#allocation21 + $0x20] sm:$0xff]
    %v1078 = vld [vmem:[#allocation21 + $0x28] sm:$0xff]
    %v1079 = vld [vmem:[#allocation21 + $0x30] sm:$0xff]
    %v1080 = vld [vmem:[#allocation21 + $0x38] sm:$0xff]
    %v1081 = vld [vmem:[#allocation21 + $0x40] sm:$0xff]
    %v1082 = vld [vmem:[#allocation21 + $0x48] sm:$0xff]
    %v1083 = vld [vmem:[#allocation21 + $0x50] sm:$0xff]
    %v1084 = vld [vmem:[#allocation21 + $0x58] sm:$0xff]
    %v1085 = vld [vmem:[#allocation21 + $0x60] sm:$0xff]
    %v1086 = vld [vmem:[#allocation21 + $0x68] sm:$0xff]
    %v1087 = vld [vmem:[#allocation21 + $0x70] sm:$0xff]
    %v1088 = vld [vmem:[#allocation21 + $0x78] sm:$0xff]
    %v1089 = vld [vmem:[%s39] sm:$0x1]
    %v1091 = vlaneseq
    %v1092 = vshrl.u32 %v1091, 7
    %v1093 = vsub.s32 0, %v1092
    %v1094 = vrot.slane %v1089, %v1093
    %1096 = vmatprep.subr.mxu0 0.0
    %1097 = vmatpush1.msra.mxu0 %v1073
    %1098 = vmatprep.subr.mxu0 0.0
    %1099 = vmatpush1.msra.mxu0 %v1074
    %1100 = vmatprep.subr.mxu0 0.0
    %1101 = vmatpush1.msra.mxu0 %v1075
    %1102 = vmatprep.subr.mxu0 0.0
    %1103 = vmatpush1.msra.mxu0 %v1076
    %1104 = vmatprep.subr.mxu0 0.0
    %1105 = vmatpush1.msra.mxu0 %v1077
    %1106 = vmatprep.subr.mxu0 0.0
    %1107 = vmatpush1.msra.mxu0 %v1078
    %1108 = vmatprep.subr.mxu0 0.0
    %1109 = vmatpush1.msra.mxu0 %v1079
    %1110 = vmatprep.subr.mxu0 0.0
    %1111 = vmatpush1.msra.mxu0 %v1080
    %1112 = vmatprep.subr.mxu0 0.0
    %1113 = vmatpush1.msra.mxu0 %v1081
    %1114 = vmatprep.subr.mxu0 0.0
    %1115 = vmatpush1.msra.mxu0 %v1082
    %1116 = vmatprep.subr.mxu0 0.0
    %1117 = vmatpush1.msra.mxu0 %v1083
    %1118 = vmatprep.subr.mxu0 0.0
    %1119 = vmatpush1.msra.mxu0 %v1084
    %1120 = vmatprep.subr.mxu0 0.0
    %1121 = vmatpush1.msra.mxu0 %v1085
    %1122 = vmatprep.subr.mxu0 0.0
    %1123 = vmatpush1.msra.mxu0 %v1086
    %1124 = vmatprep.subr.mxu0 0.0
    %1125 = vmatpush1.msra.mxu0 %v1087
    %1126 = vmatprep.subr.mxu0 0.0
    %1127 = vmatpush1.msra.mxu0 %v1088
    %1128 = vmatprep.subr.mxu0 0.0
    %1129 = vmatpush1.msra.mxu0 0.0
    %1130 = vmatprep.subr.mxu0 0.0
    %1131 = vmatpush1.msra.mxu0 0.0
    %1132 = vmatprep.subr.mxu0 0.0
    %1133 = vmatpush1.msra.mxu0 0.0
    %1134 = vmatprep.subr.mxu0 0.0
    %1135 = vmatpush1.msra.mxu0 0.0
    %1136 = vmatprep.subr.mxu0 0.0
    %1137 = vmatpush1.msra.mxu0 0.0
    %1138 = vmatprep.subr.mxu0 0.0
    %1139 = vmatpush1.msra.mxu0 0.0
    %1140 = vmatprep.subr.mxu0 0.0
    %1141 = vmatpush1.msra.mxu0 0.0
    %1142 = vmatprep.subr.mxu0 0.0
    %1143 = vmatpush1.msra.mxu0 0.0
    %1144 = vmatprep.subr.mxu0 0.0
    %1145 = vmatpush1.msra.mxu0 0.0
    %1146 = vmatprep.subr.mxu0 0.0
    %1147 = vmatpush1.msra.mxu0 0.0
    %1148 = vmatprep.subr.mxu0 0.0
    %1149 = vmatpush1.msra.mxu0 0.0
    %1150 = vmatprep.subr.mxu0 0.0
    %1151 = vmatpush1.msra.mxu0 0.0
    %1152 = vmatprep.subr.mxu0 0.0
    %1153 = vmatpush1.msra.mxu0 0.0
    %1154 = vmatprep.subr.mxu0 0.0
    %1155 = vmatpush1.msra.mxu0 0.0
    %1156 = vmatprep.subr.mxu0 0.0
    %1157 = vmatpush1.msra.mxu0 0.0
    %1158 = vmatprep.subr.mxu0 0.0
    %1159 = vmatpush1.msra.mxu0 0.0
    %1160 = vmatprep.mubr.f32.mxu0 0.0
    %1161 = vmatmul.mubr.f32.gmra.mrb[0].mxu0 %v1072
    %v1162 = vpop.f32.mrb[0].mxu0
    %v1163 = vadd.f32 %v1094, %v1162
    %v1164 = vpop.f32.mrb[0].mxu0
    %1165 = vdwg.mxu0
    %v1166 = vmax.f32 %v949, 0.0
    %v1167 = vmax.f32 %v1163, 0.0
    %v1168 = vld [vmem:[#allocation22] sm:$0xff]
    %v1169 = vld [vmem:[#allocation22 + $0x8] sm:$0xff]
    %v1170 = vld [vmem:[#allocation22 + $0x10] sm:$0xff]
    %v1171 = vld [vmem:[#allocation22 + $0x18] sm:$0xff]
    %v1172 = vld [vmem:[#allocation22 + $0x20] sm:$0xff]
    %v1173 = vld [vmem:[#allocation22 + $0x28] sm:$0xff]
    %v1174 = vld [vmem:[#allocation22 + $0x30] sm:$0xff]
    %v1175 = vld [vmem:[#allocation22 + $0x38] sm:$0xff]
    %v1176 = vld [vmem:[#allocation22 + $0x40] sm:$0xff]
    %v1177 = vld [vmem:[#allocation22 + $0x48] sm:$0xff]
    %v1178 = vld [vmem:[#allocation22 + $0x50] sm:$0xff]
    %v1179 = vld [vmem:[#allocation22 + $0x58] sm:$0xff]
    %v1180 = vld [vmem:[#allocation22 + $0x60] sm:$0xff]
    %v1181 = vld [vmem:[#allocation22 + $0x68] sm:$0xff]
    %v1182 = vld [vmem:[#allocation22 + $0x70] sm:$0xff]
    %v1183 = vld [vmem:[#allocation22 + $0x78] sm:$0xff]
    %v1184 = vld [vmem:[#allocation22 + $0x80] sm:$0xff]
    %v1185 = vld [vmem:[#allocation22 + $0x88] sm:$0xff]
    %v1186 = vld [vmem:[#allocation22 + $0x90] sm:$0xff]
    %v1187 = vld [vmem:[#allocation22 + $0x98] sm:$0xff]
    %v1188 = vld [vmem:[#allocation22 + $0xa0] sm:$0xff]
    %v1189 = vld [vmem:[#allocation22 + $0xa8] sm:$0xff]
    %v1190 = vld [vmem:[#allocation22 + $0xb0] sm:$0xff]
    %v1191 = vld [vmem:[#allocation22 + $0xb8] sm:$0xff]
    %v1192 = vld [vmem:[#allocation22 + $0xc0] sm:$0xff]
    %v1193 = vld [vmem:[#allocation22 + $0xc8] sm:$0xff]
    %v1194 = vld [vmem:[#allocation22 + $0xd0] sm:$0xff]
    %v1195 = vld [vmem:[#allocation22 + $0xd8] sm:$0xff]
    %v1196 = vld [vmem:[#allocation22 + $0xe0] sm:$0xff]
    %v1197 = vld [vmem:[#allocation22 + $0xe8] sm:$0xff]
    %v1198 = vld [vmem:[#allocation22 + $0xf0] sm:$0xff]
    %v1199 = vld [vmem:[#allocation22 + $0xf8] sm:$0xff]
    %v1200 = vld [vmem:[%s43] sm:$0x1]
    %v1202 = vlaneseq
    %v1203 = vshrl.u32 %v1202, 7
    %v1204 = vsub.s32 0, %v1203
    %v1205 = vrot.slane %v1200, %v1204
    %1207 = vmatprep.subr.mxu0 0.0
    %1208 = vmatpush1.msra.mxu0 %v1168
    %1209 = vmatprep.subr.mxu0 0.0
    %1210 = vmatpush1.msra.mxu0 %v1169
    %1211 = vmatprep.subr.mxu0 0.0
    %1212 = vmatpush1.msra.mxu0 %v1170
    %1213 = vmatprep.subr.mxu0 0.0
    %1214 = vmatpush1.msra.mxu0 %v1171
    %1215 = vmatprep.subr.mxu0 0.0
    %1216 = vmatpush1.msra.mxu0 %v1172
    %1217 = vmatprep.subr.mxu0 0.0
    %1218 = vmatpush1.msra.mxu0 %v1173
    %1219 = vmatprep.subr.mxu0 0.0
    %1220 = vmatpush1.msra.mxu0 %v1174
    %1221 = vmatprep.subr.mxu0 0.0
    %1222 = vmatpush1.msra.mxu0 %v1175
    %1223 = vmatprep.subr.mxu0 0.0
    %1224 = vmatpush1.msra.mxu0 %v1176
    %1225 = vmatprep.subr.mxu0 0.0
    %1226 = vmatpush1.msra.mxu0 %v1177
    %1227 = vmatprep.subr.mxu0 0.0
    %1228 = vmatpush1.msra.mxu0 %v1178
    %1229 = vmatprep.subr.mxu0 0.0
    %1230 = vmatpush1.msra.mxu0 %v1179
    %1231 = vmatprep.subr.mxu0 0.0
    %1232 = vmatpush1.msra.mxu0 %v1180
    %1233 = vmatprep.subr.mxu0 0.0
    %1234 = vmatpush1.msra.mxu0 %v1181
    %1235 = vmatprep.subr.mxu0 0.0
    %1236 = vmatpush1.msra.mxu0 %v1182
    %1237 = vmatprep.subr.mxu0 0.0
    %1238 = vmatpush1.msra.mxu0 %v1183
    %1239 = vmatprep.subr.mxu0 0.0
    %1240 = vmatpush1.msra.mxu0 %v1184
    %1241 = vmatprep.subr.mxu0 0.0
    %1242 = vmatpush1.msra.mxu0 %v1185
    %1243 = vmatprep.subr.mxu0 0.0
    %1244 = vmatpush1.msra.mxu0 %v1186
    %1245 = vmatprep.subr.mxu0 0.0
    %1246 = vmatpush1.msra.mxu0 %v1187
    %1247 = vmatprep.subr.mxu0 0.0
    %1248 = vmatpush1.msra.mxu0 %v1188
    %1249 = vmatprep.subr.mxu0 0.0
    %1250 = vmatpush1.msra.mxu0 %v1189
    %1251 = vmatprep.subr.mxu0 0.0
    %1252 = vmatpush1.msra.mxu0 %v1190
    %1253 = vmatprep.subr.mxu0 0.0
    %1254 = vmatpush1.msra.mxu0 %v1191
    %1255 = vmatprep.subr.mxu0 0.0
    %1256 = vmatpush1.msra.mxu0 %v1192
    %1257 = vmatprep.subr.mxu0 0.0
    %1258 = vmatpush1.msra.mxu0 %v1193
    %1259 = vmatprep.subr.mxu0 0.0
    %1260 = vmatpush1.msra.mxu0 %v1194
    %1261 = vmatprep.subr.mxu0 0.0
    %1262 = vmatpush1.msra.mxu0 %v1195
    %1263 = vmatprep.subr.mxu0 0.0
    %1264 = vmatpush1.msra.mxu0 %v1196
    %1265 = vmatprep.subr.mxu0 0.0
    %1266 = vmatpush1.msra.mxu0 %v1197
    %1267 = vmatprep.subr.mxu0 0.0
    %1268 = vmatpush1.msra.mxu0 %v1198
    %1269 = vmatprep.subr.mxu0 0.0
    %1270 = vmatpush1.msra.mxu0 %v1199
    %1271 = vmatprep.mubr.f32.mxu0 %v1167
    %1272 = vmatmul.mubr.f32.gmra.mrb[0].mxu0 %v1166
    %v1273 = vpop.f32.mrb[0].mxu0
    %v1274 = vadd.f32 %v1205, %v1273
    %v1275 = vpop.f32.mrb[0].mxu0
    %1276 = vdwg.mxu0
    %v1277 = vmax.f32 %v566, 0.0
    %v1278 = vmax.f32 %v659, 0.0
    %v1279 = vld [vmem:[#allocation24] sm:$0xff]
    %v1280 = vld [vmem:[#allocation24 + $0x8] sm:$0xff]
    %v1281 = vld [vmem:[#allocation24 + $0x10] sm:$0xff]
    %v1282 = vld [vmem:[#allocation24 + $0x18] sm:$0xff]
    %v1283 = vld [vmem:[#allocation24 + $0x20] sm:$0xff]
    %v1284 = vld [vmem:[#allocation24 + $0x28] sm:$0xff]
    %v1285 = vld [vmem:[#allocation24 + $0x30] sm:$0xff]
    %v1286 = vld [vmem:[#allocation24 + $0x38] sm:$0xff]
    %v1287 = vld [vmem:[#allocation24 + $0x40] sm:$0xff]
    %v1288 = vld [vmem:[#allocation24 + $0x48] sm:$0xff]
    %v1289 = vld [vmem:[#allocation24 + $0x50] sm:$0xff]
    %v1290 = vld [vmem:[#allocation24 + $0x58] sm:$0xff]
    %v1291 = vld [vmem:[#allocation24 + $0x60] sm:$0xff]
    %v1292 = vld [vmem:[#allocation24 + $0x68] sm:$0xff]
    %v1293 = vld [vmem:[#allocation24 + $0x70] sm:$0xff]
    %v1294 = vld [vmem:[#allocation24 + $0x78] sm:$0xff]
    %v1295 = vld [vmem:[#allocation24 + $0x80] sm:$0xff]
    %v1296 = vld [vmem:[#allocation24 + $0x88] sm:$0xff]
    %v1297 = vld [vmem:[#allocation24 + $0x90] sm:$0xff]
    %v1298 = vld [vmem:[#allocation24 + $0x98] sm:$0xff]
    %v1299 = vld [vmem:[#allocation24 + $0xa0] sm:$0xff]
    %v1300 = vld [vmem:[#allocation24 + $0xa8] sm:$0xff]
    %v1301 = vld [vmem:[#allocation24 + $0xb0] sm:$0xff]
    %v1302 = vld [vmem:[#allocation24 + $0xb8] sm:$0xff]
    %v1303 = vld [vmem:[#allocation24 + $0xc0] sm:$0xff]
    %v1304 = vld [vmem:[#allocation24 + $0xc8] sm:$0xff]
    %v1305 = vld [vmem:[#allocation24 + $0xd0] sm:$0xff]
    %v1306 = vld [vmem:[#allocation24 + $0xd8] sm:$0xff]
    %v1307 = vld [vmem:[#allocation24 + $0xe0] sm:$0xff]
    %v1308 = vld [vmem:[#allocation24 + $0xe8] sm:$0xff]
    %v1309 = vld [vmem:[#allocation24 + $0xf0] sm:$0xff]
    %v1310 = vld [vmem:[#allocation24 + $0xf8] sm:$0xff]
    %v1311 = vld [vmem:[#allocation24 + $0x100] sm:$0xff]
    %v1312 = vld [vmem:[#allocation24 + $0x108] sm:$0xff]
    %v1313 = vld [vmem:[#allocation24 + $0x110] sm:$0xff]
    %v1314 = vld [vmem:[#allocation24 + $0x118] sm:$0xff]
    %v1315 = vld [vmem:[#allocation24 + $0x120] sm:$0xff]
    %v1316 = vld [vmem:[#allocation24 + $0x128] sm:$0xff]
    %v1317 = vld [vmem:[#allocation24 + $0x130] sm:$0xff]
    %v1318 = vld [vmem:[#allocation24 + $0x138] sm:$0xff]
    %v1319 = vld [vmem:[#allocation24 + $0x140] sm:$0xff]
    %v1320 = vld [vmem:[#allocation24 + $0x148] sm:$0xff]
    %v1321 = vld [vmem:[#allocation24 + $0x150] sm:$0xff]
    %v1322 = vld [vmem:[#allocation24 + $0x158] sm:$0xff]
    %v1323 = vld [vmem:[#allocation24 + $0x160] sm:$0xff]
    %v1324 = vld [vmem:[#allocation24 + $0x168] sm:$0xff]
    %v1325 = vld [vmem:[#allocation24 + $0x170] sm:$0xff]
    %v1326 = vld [vmem:[#allocation24 + $0x178] sm:$0xff]
    %v1327 = vld [vmem:[#allocation24 + $0x180] sm:$0xff]
    %v1328 = vld [vmem:[#allocation24 + $0x188] sm:$0xff]
    %v1329 = vld [vmem:[#allocation24 + $0x190] sm:$0xff]
    %v1330 = vld [vmem:[#allocation24 + $0x198] sm:$0xff]
    %v1331 = vld [vmem:[#allocation24 + $0x1a0] sm:$0xff]
    %v1332 = vld [vmem:[#allocation24 + $0x1a8] sm:$0xff]
    %v1333 = vld [vmem:[#allocation24 + $0x1b0] sm:$0xff]
    %v1334 = vld [vmem:[#allocation24 + $0x1b8] sm:$0xff]
    %v1335 = vld [vmem:[#allocation24 + $0x1c0] sm:$0xff]
    %v1336 = vld [vmem:[#allocation24 + $0x1c8] sm:$0xff]
    %v1337 = vld [vmem:[#allocation24 + $0x1d0] sm:$0xff]
    %v1338 = vld [vmem:[#allocation24 + $0x1d8] sm:$0xff]
    %v1339 = vld [vmem:[#allocation24 + $0x1e0] sm:$0xff]
    %v1340 = vld [vmem:[#allocation24 + $0x1e8] sm:$0xff]
    %v1341 = vld [vmem:[#allocation24 + $0x1f0] sm:$0xff]
    %v1342 = vld [vmem:[#allocation24 + $0x1f8] sm:$0xff]
    %v1343 = vld [vmem:[%s47] sm:$0x3]
    %v1345 = vlaneseq
    %v1346 = vshrl.u32 %v1345, 7
    %v1347 = vsub.s32 0, %v1346
    %v1348 = vrot.slane %v1343, %v1347
    %v1349 = vlaneseq
    %v1350 = vshrl.u32 %v1349, 7
    %v1351 = vsub.s32 1, %v1350
    %v1352 = vrot.slane %v1343, %v1351
    %1355 = vmatprep.subr.mxu0 %v1280
    %1356 = vmatpush1.msra.mxu0 %v1279
    %1357 = vmatprep.subr.mxu0 %v1282
    %1358 = vmatpush1.msra.mxu0 %v1281
    %1359 = vmatprep.subr.mxu0 %v1284
    %1360 = vmatpush1.msra.mxu0 %v1283
    %1361 = vmatprep.subr.mxu0 %v1286
    %1362 = vmatpush1.msra.mxu0 %v1285
    %1363 = vmatprep.subr.mxu0 %v1288
    %1364 = vmatpush1.msra.mxu0 %v1287
    %1365 = vmatprep.subr.mxu0 %v1290
    %1366 = vmatpush1.msra.mxu0 %v1289
    %1367 = vmatprep.subr.mxu0 %v1292
    %1368 = vmatpush1.msra.mxu0 %v1291
    %1369 = vmatprep.subr.mxu0 %v1294
    %1370 = vmatpush1.msra.mxu0 %v1293
    %1371 = vmatprep.subr.mxu0 %v1296
    %1372 = vmatpush1.msra.mxu0 %v1295
    %1373 = vmatprep.subr.mxu0 %v1298
    %1374 = vmatpush1.msra.mxu0 %v1297
    %1375 = vmatprep.subr.mxu0 %v1300
    %1376 = vmatpush1.msra.mxu0 %v1299
    %1377 = vmatprep.subr.mxu0 %v1302
    %1378 = vmatpush1.msra.mxu0 %v1301
    %1379 = vmatprep.subr.mxu0 %v1304
    %1380 = vmatpush1.msra.mxu0 %v1303
    %1381 = vmatprep.subr.mxu0 %v1306
    %1382 = vmatpush1.msra.mxu0 %v1305
    %1383 = vmatprep.subr.mxu0 %v1308
    %1384 = vmatpush1.msra.mxu0 %v1307
    %1385 = vmatprep.subr.mxu0 %v1310
    %1386 = vmatpush1.msra.mxu0 %v1309
    %1387 = vmatprep.subr.mxu0 %v1312
    %1388 = vmatpush1.msra.mxu0 %v1311
    %1389 = vmatprep.subr.mxu0 %v1314
    %1390 = vmatpush1.msra.mxu0 %v1313
    %1391 = vmatprep.subr.mxu0 %v1316
    %1392 = vmatpush1.msra.mxu0 %v1315
    %1393 = vmatprep.subr.mxu0 %v1318
    %1394 = vmatpush1.msra.mxu0 %v1317
    %1395 = vmatprep.subr.mxu0 %v1320
    %1396 = vmatpush1.msra.mxu0 %v1319
    %1397 = vmatprep.subr.mxu0 %v1322
    %1398 = vmatpush1.msra.mxu0 %v1321
    %1399 = vmatprep.subr.mxu0 %v1324
    %1400 = vmatpush1.msra.mxu0 %v1323
    %1401 = vmatprep.subr.mxu0 %v1326
    %1402 = vmatpush1.msra.mxu0 %v1325
    %1403 = vmatprep.subr.mxu0 %v1328
    %1404 = vmatpush1.msra.mxu0 %v1327
    %1405 = vmatprep.subr.mxu0 %v1330
    %1406 = vmatpush1.msra.mxu0 %v1329
    %1407 = vmatprep.subr.mxu0 %v1332
    %1408 = vmatpush1.msra.mxu0 %v1331
    %1409 = vmatprep.subr.mxu0 %v1334
    %1410 = vmatpush1.msra.mxu0 %v1333
    %1411 = vmatprep.subr.mxu0 %v1336
    %1412 = vmatpush1.msra.mxu0 %v1335
    %1413 = vmatprep.subr.mxu0 %v1338
    %1414 = vmatpush1.msra.mxu0 %v1337
    %1415 = vmatprep.subr.mxu0 %v1340
    %1416 = vmatpush1.msra.mxu0 %v1339
    %1417 = vmatprep.subr.mxu0 %v1342
    %1418 = vmatpush1.msra.mxu0 %v1341
    %1419 = vmatprep.mubr.f32.mxu0 %v1278
    %1420 = vmatmul.mubr.f32.gmra.mrb[0].mxu0 %v1277
    %v1421 = vpop.f32.mrb[0].mxu0
    %v1422 = vadd.f32 %v1348, %v1421
    %v1423 = vpop.f32.mrb[0].mxu0
    %v1424 = vadd.f32 %v1352, %v1423
    %1425 = vdwg.mxu0
    %v1426 = vmax.f32 %v1422, 0.0
    %v1427 = vmax.f32 %v1424, 0.0
    %v1428 = vmax.f32 %v1274, 0.0
    %v1429 = vld [vmem:[#allocation25] sm:$0xff]
    %v1430 = vld [vmem:[#allocation25 + $0x8] sm:$0xff]
    %v1431 = vld [vmem:[#allocation25 + $0x10] sm:$0xff]
    %v1432 = vld [vmem:[#allocation25 + $0x18] sm:$0xff]
    %v1433 = vld [vmem:[#allocation25 + $0x20] sm:$0xff]
    %v1434 = vld [vmem:[#allocation25 + $0x28] sm:$0xff]
    %v1435 = vld [vmem:[#allocation25 + $0x30] sm:$0xff]
    %v1436 = vld [vmem:[#allocation25 + $0x38] sm:$0xff]
    %v1437 = vld [vmem:[#allocation25 + $0x40] sm:$0xff]
    %v1438 = vld [vmem:[#allocation25 + $0x48] sm:$0xff]
    %v1439 = vld [vmem:[#allocation25 + $0x50] sm:$0xff]
    %v1440 = vld [vmem:[#allocation25 + $0x58] sm:$0xff]
    %v1441 = vld [vmem:[#allocation25 + $0x60] sm:$0xff]
    %v1442 = vld [vmem:[#allocation25 + $0x68] sm:$0xff]
    %v1443 = vld [vmem:[#allocation25 + $0x70] sm:$0xff]
    %v1444 = vld [vmem:[#allocation25 + $0x78] sm:$0xff]
    %v1445 = vld [vmem:[#allocation25 + $0x80] sm:$0xff]
    %v1446 = vld [vmem:[#allocation25 + $0x88] sm:$0xff]
    %v1447 = vld [vmem:[#allocation25 + $0x90] sm:$0xff]
    %v1448 = vld [vmem:[#allocation25 + $0x98] sm:$0xff]
    %v1449 = vld [vmem:[#allocation25 + $0xa0] sm:$0xff]
    %v1450 = vld [vmem:[#allocation25 + $0xa8] sm:$0xff]
    %v1451 = vld [vmem:[#allocation25 + $0xb0] sm:$0xff]
    %v1452 = vld [vmem:[#allocation25 + $0xb8] sm:$0xff]
    %v1453 = vld [vmem:[#allocation25 + $0xc0] sm:$0xff]
    %v1454 = vld [vmem:[#allocation25 + $0xc8] sm:$0xff]
    %v1455 = vld [vmem:[#allocation25 + $0xd0] sm:$0xff]
    %v1456 = vld [vmem:[#allocation25 + $0xd8] sm:$0xff]
    %v1457 = vld [vmem:[#allocation25 + $0xe0] sm:$0xff]
    %v1458 = vld [vmem:[#allocation25 + $0xe8] sm:$0xff]
    %v1459 = vld [vmem:[#allocation25 + $0xf0] sm:$0xff]
    %v1460 = vld [vmem:[#allocation25 + $0xf8] sm:$0xff]
    %v1461 = vld [vmem:[#allocation25 + $0x100] sm:$0xff]
    %v1462 = vld [vmem:[#allocation25 + $0x108] sm:$0xff]
    %v1463 = vld [vmem:[#allocation25 + $0x110] sm:$0xff]
    %v1464 = vld [vmem:[#allocation25 + $0x118] sm:$0xff]
    %v1465 = vld [vmem:[#allocation25 + $0x120] sm:$0xff]
    %v1466 = vld [vmem:[#allocation25 + $0x128] sm:$0xff]
    %v1467 = vld [vmem:[#allocation25 + $0x130] sm:$0xff]
    %v1468 = vld [vmem:[#allocation25 + $0x138] sm:$0xff]
    %v1469 = vld [vmem:[#allocation25 + $0x140] sm:$0xff]
    %v1470 = vld [vmem:[#allocation25 + $0x148] sm:$0xff]
    %v1471 = vld [vmem:[#allocation25 + $0x150] sm:$0xff]
    %v1472 = vld [vmem:[#allocation25 + $0x158] sm:$0xff]
    %v1473 = vld [vmem:[#allocation25 + $0x160] sm:$0xff]
    %v1474 = vld [vmem:[#allocation25 + $0x168] sm:$0xff]
    %v1475 = vld [vmem:[#allocation25 + $0x170] sm:$0xff]
    %v1476 = vld [vmem:[#allocation25 + $0x178] sm:$0xff]
    %v1477 = vld [vmem:[#allocation25 + $0x180] sm:$0xff]
    %v1478 = vld [vmem:[#allocation25 + $0x188] sm:$0xff]
    %v1479 = vld [vmem:[#allocation25 + $0x190] sm:$0xff]
    %v1480 = vld [vmem:[#allocation25 + $0x198] sm:$0xff]
    %v1481 = vld [vmem:[#allocation25 + $0x1a0] sm:$0xff]
    %v1482 = vld [vmem:[#allocation25 + $0x1a8] sm:$0xff]
    %v1483 = vld [vmem:[#allocation25 + $0x1b0] sm:$0xff]
    %v1484 = vld [vmem:[#allocation25 + $0x1b8] sm:$0xff]
    %v1485 = vld [vmem:[#allocation25 + $0x1c0] sm:$0xff]
    %v1486 = vld [vmem:[#allocation25 + $0x1c8] sm:$0xff]
    %v1487 = vld [vmem:[#allocation25 + $0x1d0] sm:$0xff]
    %v1488 = vld [vmem:[#allocation25 + $0x1d8] sm:$0xff]
    %v1489 = vld [vmem:[#allocation25 + $0x1e0] sm:$0xff]
    %v1490 = vld [vmem:[#allocation25 + $0x1e8] sm:$0xff]
    %v1491 = vld [vmem:[#allocation25 + $0x1f0] sm:$0xff]
    %v1492 = vld [vmem:[#allocation25 + $0x1f8] sm:$0xff]
    %v1493 = vld [vmem:[%s51] sm:$0x3]
    %v1495 = vlaneseq
    %v1496 = vshrl.u32 %v1495, 7
    %v1497 = vsub.s32 0, %v1496
    %v1498 = vrot.slane %v1493, %v1497
    %v1499 = vlaneseq
    %v1500 = vshrl.u32 %v1499, 7
    %v1501 = vsub.s32 1, %v1500
    %v1502 = vrot.slane %v1493, %v1501
    %1505 = vmatprep.subr.mxu0 %v1430
    %1506 = vmatpush1.msra.mxu0 %v1429
    %1507 = vmatprep.subr.mxu0 %v1432
    %1508 = vmatpush1.msra.mxu0 %v1431
    %1509 = vmatprep.subr.mxu0 %v1434
    %1510 = vmatpush1.msra.mxu0 %v1433
    %1511 = vmatprep.subr.mxu0 %v1436
    %1512 = vmatpush1.msra.mxu0 %v1435
    %1513 = vmatprep.subr.mxu0 %v1438
    %1514 = vmatpush1.msra.mxu0 %v1437
    %1515 = vmatprep.subr.mxu0 %v1440
    %1516 = vmatpush1.msra.mxu0 %v1439
    %1517 = vmatprep.subr.mxu0 %v1442
    %1518 = vmatpush1.msra.mxu0 %v1441
    %1519 = vmatprep.subr.mxu0 %v1444
    %1520 = vmatpush1.msra.mxu0 %v1443
    %1521 = vmatprep.subr.mxu0 %v1446
    %1522 = vmatpush1.msra.mxu0 %v1445
    %1523 = vmatprep.subr.mxu0 %v1448
    %1524 = vmatpush1.msra.mxu0 %v1447
    %1525 = vmatprep.subr.mxu0 %v1450
    %1526 = vmatpush1.msra.mxu0 %v1449
    %1527 = vmatprep.subr.mxu0 %v1452
    %1528 = vmatpush1.msra.mxu0 %v1451
    %1529 = vmatprep.subr.mxu0 %v1454
    %1530 = vmatpush1.msra.mxu0 %v1453
    %1531 = vmatprep.subr.mxu0 %v1456
    %1532 = vmatpush1.msra.mxu0 %v1455
    %1533 = vmatprep.subr.mxu0 %v1458
    %1534 = vmatpush1.msra.mxu0 %v1457
    %1535 = vmatprep.subr.mxu0 %v1460
    %1536 = vmatpush1.msra.mxu0 %v1459
    %1537 = vmatprep.subr.mxu0 %v1462
    %1538 = vmatpush1.msra.mxu0 %v1461
    %1539 = vmatprep.subr.mxu0 %v1464
    %1540 = vmatpush1.msra.mxu0 %v1463
    %1541 = vmatprep.subr.mxu0 %v1466
    %1542 = vmatpush1.msra.mxu0 %v1465
    %1543 = vmatprep.subr.mxu0 %v1468
    %1544 = vmatpush1.msra.mxu0 %v1467
    %1545 = vmatprep.subr.mxu0 %v1470
    %1546 = vmatpush1.msra.mxu0 %v1469
    %1547 = vmatprep.subr.mxu0 %v1472
    %1548 = vmatpush1.msra.mxu0 %v1471
    %1549 = vmatprep.subr.mxu0 %v1474
    %1550 = vmatpush1.msra.mxu0 %v1473
    %1551 = vmatprep.subr.mxu0 %v1476
    %1552 = vmatpush1.msra.mxu0 %v1475
    %1553 = vmatprep.subr.mxu0 %v1478
    %1554 = vmatpush1.msra.mxu0 %v1477
    %1555 = vmatprep.subr.mxu0 %v1480
    %1556 = vmatpush1.msra.mxu0 %v1479
    %1557 = vmatprep.subr.mxu0 %v1482
    %1558 = vmatpush1.msra.mxu0 %v1481
    %1559 = vmatprep.subr.mxu0 %v1484
    %1560 = vmatpush1.msra.mxu0 %v1483
    %1561 = vmatprep.subr.mxu0 %v1486
    %1562 = vmatpush1.msra.mxu0 %v1485
    %1563 = vmatprep.subr.mxu0 %v1488
    %1564 = vmatpush1.msra.mxu0 %v1487
    %1565 = vmatprep.subr.mxu0 %v1490
    %1566 = vmatpush1.msra.mxu0 %v1489
    %1567 = vmatprep.subr.mxu0 %v1492
    %1568 = vmatpush1.msra.mxu0 %v1491
    %1569 = vmatprep.mubr.f32.mxu0 %v1278
    %1570 = vmatmul.mubr.f32.gmra.mrb[0].mxu0 %v1428
    %v1571 = vpop.f32.mrb[0].mxu0
    %v1572 = vadd.f32 %v1498, %v1571
    %v1573 = vpop.f32.mrb[0].mxu0
    %v1574 = vadd.f32 %v1502, %v1573
    %1575 = vdwg.mxu0
    %v1576 = vmax.f32 %v1572, 0.0
    %v1577 = vmax.f32 %v1574, 0.0
    %1578 = vst [vmem:[#allocation27] sm:$0xff] %v566
    %1579 = vst [vmem:[#allocation28] sm:$0xff] %v659
    %1580 = vst [vmem:[#allocation30] sm:$0xff] %v764
    %1581 = vst [vmem:[#allocation31] sm:$0xff] %v1274
    %1582 = vst [vmem:[#allocation33] sm:$0xff] %v1426
    %1583 = vst [vmem:[#allocation33 + $0x8] sm:$0xff] %v1427
    %1584 = vst [vmem:[#allocation34] sm:$0xff] %v1576
    %1585 = vst [vmem:[#allocation34 + $0x8] sm:$0xff] %v1577
    // Predicated region
    $region166: #{tpu_custom_call.1} parent=1 // pred_check
      _
    $region167: #{tpu_custom_call.1} parent=1 // pred_check_branch
      %1587 = sbr.rel (0) target = $region169
    $region168: #{tpu_custom_call.1} parent=1 // pred_region
      %s1589 = ssub.s32 128, 128
      %1590 = vsyncadd [#allocation4], %s1589
      %s1592 = sshll.u32 [#allocation27], 4
      %s1593 = int_to_ptr.vmem [resolvable:$true] %s1592
      %1595 = dma.vmem_to_hbm [thread:$0]  %s1593, 128, %s53, [#allocation4]
    $region169: #{tpu_custom_call.1} parent=1 // pred_fallthru
      _
    // Predicated region
    $region170: #{tpu_custom_call.1} parent=1 // pred_check
      _
    $region171: #{tpu_custom_call.1} parent=1 // pred_check_branch
      %1597 = sbr.rel (0) target = $region173
    $region172: #{tpu_custom_call.1} parent=1 // pred_region
      %s1599 = ssub.s32 128, 128
      %1600 = vsyncadd [#allocation29], %s1599
      %s1602 = sshll.u32 [#allocation28], 4
      %s1603 = int_to_ptr.vmem [resolvable:$true] %s1602
      %1605 = dma.vmem_to_hbm [thread:$0]  %s1603, 128, %s55, [#allocation29]
    $region173: #{tpu_custom_call.1} parent=1 // pred_fallthru
      _
    // Predicated region
    $region174: #{tpu_custom_call.1} parent=1 // pred_check
      _
    $region175: #{tpu_custom_call.1} parent=1 // pred_check_branch
      %1607 = sbr.rel (0) target = $region177
    $region176: #{tpu_custom_call.1} parent=1 // pred_region
      %s1609 = ssub.s32 128, 128
      %1610 = vsyncadd [#allocation29], %s1609
      %s1612 = sshll.u32 [#allocation30], 4
      %s1613 = int_to_ptr.vmem [resolvable:$true] %s1612
      %1615 = dma.vmem_to_hbm [thread:$0]  %s1613, 128, %s57, [#allocation29]
    $region177: #{tpu_custom_call.1} parent=1 // pred_fallthru
      _
    // Predicated region
    $region178: #{tpu_custom_call.1} parent=1 // pred_check
      _
    $region179: #{tpu_custom_call.1} parent=1 // pred_check_branch
      %1617 = sbr.rel (0) target = $region181
    $region180: #{tpu_custom_call.1} parent=1 // pred_region
      %s1619 = ssub.s32 128, 128
      %1620 = vsyncadd [#allocation32], %s1619
      %s1622 = sshll.u32 [#allocation31], 4
      %s1623 = int_to_ptr.vmem [resolvable:$true] %s1622
      %1625 = dma.vmem_to_hbm [thread:$0]  %s1623, 128, %s59, [#allocation32]
    $region181: #{tpu_custom_call.1} parent=1 // pred_fallthru
      _
    // Predicated region
    $region182: #{tpu_custom_call.1} parent=1 // pred_check
      _
    $region183: #{tpu_custom_call.1} parent=1 // pred_check_branch
      %1627 = sbr.rel (0) target = $region185
    $region184: #{tpu_custom_call.1} parent=1 // pred_region
      %s1629 = ssub.s32 256, 256
      %1630 = vsyncadd [#allocation32], %s1629
      %s1632 = sshll.u32 [#allocation33], 4
      %s1633 = int_to_ptr.vmem [resolvable:$true] %s1632
      %1635 = dma.vmem_to_hbm [thread:$0]  %s1633, 256, %s61, [#allocation32]
    $region185: #{tpu_custom_call.1} parent=1 // pred_fallthru
      _
    // Predicated region
    $region186: #{tpu_custom_call.1} parent=1 // pred_check
      _
    $region187: #{tpu_custom_call.1} parent=1 // pred_check_branch
      %1637 = sbr.rel (0) target = $region189
    $region188: #{tpu_custom_call.1} parent=1 // pred_region
      %s1639 = ssub.s32 256, 256
      %1640 = vsyncadd [#allocation35], %s1639
      %s1642 = sshll.u32 [#allocation34], 4
      %s1643 = int_to_ptr.vmem [resolvable:$true] %s1642
      %1645 = dma.vmem_to_hbm [thread:$0]  %s1643, 256, %s63, [#allocation35]
    $region189: #{tpu_custom_call.1} parent=1 // pred_fallthru
      _
    // Predicated region
    $region190: #{tpu_custom_call.1} parent=1 // pred_check
      _
    $region191: #{tpu_custom_call.1} parent=1 // pred_check_branch
      %1647 = sbr.rel (0) target = $region193
    $region192: #{tpu_custom_call.1} parent=1 // pred_region
      %1648 = dma.done [#allocation4], 128
    $region193: #{tpu_custom_call.1} parent=1 // pred_fallthru
      _
    // Predicated region
    $region194: #{tpu_custom_call.1} parent=1 // pred_check
      _
    $region195: #{tpu_custom_call.1} parent=1 // pred_check_branch
      %1650 = sbr.rel (0) target = $region197
    $region196: #{tpu_custom_call.1} parent=1 // pred_region
      %1651 = dma.done [#allocation29], 128
    $region197: #{tpu_custom_call.1} parent=1 // pred_fallthru
      _
    // Predicated region
    $region198: #{tpu_custom_call.1} parent=1 // pred_check
      _
    $region199: #{tpu_custom_call.1} parent=1 // pred_check_branch
      %1653 = sbr.rel (0) target = $region201
    $region200: #{tpu_custom_call.1} parent=1 // pred_region
      %1654 = dma.done [#allocation29], 128
    $region201: #{tpu_custom_call.1} parent=1 // pred_fallthru
      _
    // Predicated region
    $region202: #{tpu_custom_call.1} parent=1 // pred_check
      _
    $region203: #{tpu_custom_call.1} parent=1 // pred_check_branch
      %1656 = sbr.rel (0) target = $region205
    $region204: #{tpu_custom_call.1} parent=1 // pred_region
      %1657 = dma.done [#allocation32], 128
    $region205: #{tpu_custom_call.1} parent=1 // pred_fallthru
      _
    // Predicated region
    $region206: #{tpu_custom_call.1} parent=1 // pred_check
      _
    $region207: #{tpu_custom_call.1} parent=1 // pred_check_branch
      %1659 = sbr.rel (0) target = $region209
    $region208: #{tpu_custom_call.1} parent=1 // pred_region
      %1660 = dma.done [#allocation32], 256
    $region209: #{tpu_custom_call.1} parent=1 // pred_fallthru
      _
    // Predicated region
    $region210: #{tpu_custom_call.1} parent=1 // pred_check
      _
    $region211: #{tpu_custom_call.1} parent=1 // pred_check_branch
      %1662 = sbr.rel (0) target = $region213
    $region212: #{tpu_custom_call.1} parent=1 // pred_region
      %1663 = dma.done [#allocation35], 256
    $region213: #{tpu_custom_call.1} parent=1 // pred_fallthru
      _
    %1664 = vsyncpa [#allocation3], 1
    %1665 = vsyncpa [#allocation7], 1
    %1666 = vsyncpa [#allocation11], 1
    %1667 = vsyncpa [#allocation14], 1
    %1668 = vsyncpa [#allocation17], 1
    %1669 = vsyncpa [#allocation20], 1
    %1670 = vsyncpa [#allocation23], 1
    %1671 = vsyncpa [#allocation26], 1
    %1672 = vsyncpa [#allocation4], 1
    %1673 = vsyncpa [#allocation29], 1
    %1674 = vsyncpa [#allocation32], 1
    %1675 = vsyncpa [#allocation35], 1
    %1676 = vsyncpa [#allocation5], 1

</llo_original>
